<compile_context>
chip_gen: v5e
topology: v5e:2x2
jax: 0.10.0
libtpu: 0.0.40
codegen_flags: <defaults>
</compile_context>

<pallas_src>
import functools
import math

import jax
import jax.numpy as jnp
from jax import lax
from jax.experimental import pallas as pl
from jax.experimental.pallas import tpu as pltpu


def _round_up(x: int, m: int) -> int:
    return ((x + m - 1) // m) * m


def _vmem_budget_bytes() -> tuple:
    """(scoped vmem limit, per-grid-step footprint budget) for the local TPU."""
    kind = ""
    try:
        kind = (jax.devices()[0].device_kind or "").lower()
    except Exception:
        pass
    if "v2" in kind or "v3" in kind:
        return 16 * 1024 * 1024, 10 * 1024 * 1024
    if any(t in kind for t in ("v4", "v5", "v6")):
        # 128 MiB physical VMEM: big strips, generous scoped limit.
        return 96 * 1024 * 1024, 64 * 1024 * 1024
    # v7x (64 MiB VMEM per TensorCore) and unknown chips: stay conservative.
    return 48 * 1024 * 1024, 32 * 1024 * 1024


def _pick_row_tile(ho: int, wsp: int, c: int, in_item: int, out_item: int,
                   n_batch: int, budget_bytes: int) -> int:
    """Output-row strip height from a crude per-row VMEM model:
         2 pipeline buffers x (even + odd input rows) -> 2*2 * wsp*2c*in_item
         2 pipeline buffers x output rows             -> 2   * wsp*c*out_item
         f32 temporaries (r_e 4c, r_o 2c, ~6c sums)   -> ~12 * wsp*c*4
    """
    row_bytes = wsp * c * (8 * in_item + 2 * out_item + 48)
    th = max(1, min(ho, budget_bytes // max(row_bytes, 1)))
    if n_batch == 1:
        # keep >= 2 row strips so both TensorCores (v7x megacore) get work
        th = min(th, max(1, ho // 2))
    # prefer an exact divisor of ho (no ragged last strip) close to the budget
    for cand in range(th, max(1, th // 2) - 1, -1):
        if ho % cand == 0:
            return cand
    return th


def _downsample_kernel(e_ref, o_ref, hl_ref, we_ref, wo_ref, b_ref, out_ref):
    """One (batch, row-strip) tile of the padded stride-2 3x3 conv.

    e_ref:   (1, th, 1, wsp, 2C)  even input rows 2*(i0+t), column pairs
    o_ref:   (1, th, 1, wsp, 2C)  odd  input rows 2*(i0+t)+1
    hl_ref:  (1, 1,  1, wsp, 2C)  even input row  2*(i0+th)          (row halo)
    we_ref:  (2C, 4C)  [[W00 W20 W02 W22], [W01 W21 0 0]]
    wo_ref:  (2C, 2C)  [[W10 W12], [W11 0]]
    b_ref:   (1, C)    bias (f32)
    out_ref: (1, th, Wo, C)
    """
    _, th, _, wsp, c2 = e_ref.shape
    c = c2 // 2
    wo = out_ref.shape[2]
    m = th * wsp
    f32 = jnp.float32

    # wsp is a multiple of 8, so these reshapes are sublane-aligned (no copy).
    e2 = e_ref[...].reshape(m, c2)
    o2 = o_ref[...].reshape(m, c2)
    h2 = hl_ref[...].reshape(wsp, c2)

    r_e = jnp.dot(e2, we_ref[...], preferred_element_type=f32)   # (m, 4C)
    r_o = jnp.dot(o2, wo_ref[...], preferred_element_type=f32)   # (m, 2C)
    r_h = jnp.dot(h2, we_ref[...], preferred_element_type=f32)   # (wsp, 4C)

    bias = b_ref[...].astype(f32)                                # (1, C)

    # f32 partial sums per (strip row, super-column); tap (kh, kw) naming below.
    acc = (r_e[:, 0:c] + r_o[:, 0:c] + bias).reshape(th, wsp, c)      # (0,0)(0,1)(1,0)(1,1)
    y = (r_e[:, 2 * c:3 * c] + r_o[:, c:2 * c]).reshape(th, wsp, c)   # (0,2)(1,2) @ col j+1
    g = r_e[:, c:2 * c].reshape(th, wsp, c)                           # (2,0)(2,1) @ row t+1
    f = r_e[:, 3 * c:4 * c].reshape(th, wsp, c)                       # (2,2)      @ row t+1, col j+1
    ghl = r_h[:, c:2 * c]                                             # halo row: (2,0)(2,1)
    fhl = r_h[:, 3 * c:4 * c]                                         # halo row: (2,2) @ col j+1

    dt = out_ref.dtype
    if th > 1:
        out_ref[0, :th - 1] = (acc[:th - 1, :wo] + y[:th - 1, 1:wo + 1]
                               + g[1:, :wo] + f[1:, 1:wo + 1]).astype(dt)
    out_ref[0, th - 1] = (acc[th - 1, :wo] + y[th - 1, 1:wo + 1]
                          + ghl[:wo] + fhl[1:wo + 1]).astype(dt)


@functools.partial(jax.jit, static_argnames=("use_bf16",))
def emu3_downsample_nhwc(x, weight_oihw, bias, *, use_bf16: bool = False):
    """Production entry point: NHWC in, NHWC out (no layout transposes).

    x:           (N, H, W, C), H and W even
    weight_oihw: (C, C, 3, 3)  (PyTorch Conv2d layout)
    bias:        (C,)
    returns:     (N, H//2, W//2, C)
    """
    n, h, w, c = x.shape
    if h % 2 or w % 2:
        # TODO(synk): odd H/W (still defined by PyTorch's pad(0,1,0,1) +
        # stride-2 conv) is not handled by this even-size row/col-pair scheme.
        raise NotImplementedError("emu3_downsample_nhwc requires even H and W")
    ho, wo = h // 2, w // 2
    out_dtype = x.dtype
    cdt = jnp.bfloat16 if use_bf16 else x.dtype
    in_item = jnp.dtype(cdt).itemsize
    out_item = jnp.dtype(out_dtype).itemsize

    # Super-column count: >= wo+1 (PyTorch's right zero-pad lives in column
    # 2*wo) and a multiple of 8 so in-kernel reshapes stay sublane-aligned.
    wsp = _round_up(wo + 1, 8)

    vmem_limit, budget = _vmem_budget_bytes()
    budget = max(budget - 12 * c * c * in_item - 4 * wsp * c * in_item, budget // 4)
    th = _pick_row_tile(ho, wsp, c, in_item, out_item, n, budget)
    nr = -(-ho // th)                 # ragged last strip allowed (masked writeback)
    npairs = nr * th + 1              # +1 row pair keeps the halo block in bounds

    # Single extra HBM pass: zero-pad rows/cols.  Everything below is a free
    # contiguous reshape -- no transposes anywhere in the wrapper.
    hp, wp = 2 * npairs, 2 * wsp
    xp = jnp.pad(x.astype(cdt), ((0, 0), (0, hp - h), (0, wp - w), (0, 0)))
    xv = xp.reshape(n, npairs, 2, wsp, 2 * c)   # (n, row pair, row phase, col pair, 2C)

    # Pack the 9 taps.  wt[kh, kw] is (Cin, Cout).
    wt = jnp.transpose(weight_oihw, (2, 3, 1, 0)).astype(cdt)
    z = jnp.zeros((c, c), cdt)
    w_e = jnp.concatenate(
        [jnp.concatenate([wt[0, 0], wt[2, 0], wt[0, 2], wt[2, 2]], axis=1),
         jnp.concatenate([wt[0, 1], wt[2, 1], z, z], axis=1)], axis=0)   # (2C, 4C)
    w_o = jnp.concatenate(
        [jnp.concatenate([wt[1, 0], wt[1, 2]], axis=1),
         jnp.concatenate([wt[1, 1], z], axis=1)], axis=0)                # (2C, 2C)
    b2 = bias.reshape(1, c).astype(jnp.float32)

    cost = pl.CostEstimate(
        flops=2 * 9 * n * ho * wo * c * c,
        transcendentals=0,
        bytes_accessed=(n * hp * wp * c * in_item
                        + n * ho * wo * c * out_item
                        + 12 * c * c * in_item + 4 * c),
    )

    c2 = 2 * c
    out = pl.pallas_call(
        _downsample_kernel,
        out_shape=jax.ShapeDtypeStruct((n, ho, wo, c), out_dtype),
        grid=(n, nr),
        in_specs=[
            # even rows of the strip (row phase 0)
            pl.BlockSpec((1, th, 1, wsp, c2), lambda b, r: (b, r, 0, 0, 0)),
            # odd rows of the strip (row phase 1)
            pl.BlockSpec((1, th, 1, wsp, c2), lambda b, r: (b, r, 1, 0, 0)),
            # 1-row halo: even row of the next row pair
            pl.BlockSpec((1, 1, 1, wsp, c2), lambda b, r: (b, (r + 1) * th, 0, 0, 0)),
            # constants: whole-array VMEM residents (single buffer, fetched once)
            pl.BlockSpec(memory_space=pltpu.MemorySpace.VMEM),   # w_e
            pl.BlockSpec(memory_space=pltpu.MemorySpace.VMEM),   # w_o
            pl.BlockSpec(memory_space=pltpu.MemorySpace.VMEM),   # bias
        ],
        out_specs=pl.BlockSpec((1, th, wo, c), lambda b, r: (b, r, 0, 0)),
        compiler_params=pltpu.CompilerParams(
            dimension_semantics=("parallel", "parallel"),
            vmem_limit_bytes=vmem_limit,
        ),
        cost_estimate=cost,
    )(xv, xv, xv, w_e, w_o, b2)
    return out


@functools.partial(jax.jit, static_argnames=("use_bf16",))
def emu3_downsample(x_nchw, weight_oihw, bias, *, use_bf16: bool = False):
    """Drop-in equivalent of Emu3VisionVQDownsample.forward (NCHW in / NCHW out).

    The two transposes here are layout-compat plumbing only; production code
    should stay NHWC end-to-end and call emu3_downsample_nhwc directly (saves
    two full-tensor HBM round trips).
    """
    x_nhwc = jnp.transpose(x_nchw, (0, 2, 3, 1))
    y = emu3_downsample_nhwc(x_nhwc, weight_oihw, bias, use_bf16=use_bf16)
    return jnp.transpose(y, (0, 3, 1, 2))


def _reference_nchw(x_nchw, weight_oihw, bias):
    # Plain-JAX reference matching PyTorch: pad (0,1,0,1) then stride-2 valid conv.
    out = lax.conv_general_dilated(
        x_nchw, weight_oihw,
        window_strides=(2, 2),
        padding=[(0, 1), (0, 1)],
        dimension_numbers=("NCHW", "OIHW", "NCHW"),
        precision=lax.Precision.HIGHEST,
    )
    return out + bias[None, :, None, None]


if __name__ == "__main__":
    N, C, H, W = 2, 4, 16, 16

    key = jax.random.PRNGKey(0)
    kx, kw, kb = jax.random.split(key, 3)

    x = jax.random.normal(kx, (N, C, H, W), dtype=jnp.float32)
    # Deterministic "Conv2d.__init__"-style params (uniform in +/- 1/sqrt(fan_in)).
    fan_in = C * 3 * 3
    bound = 1.0 / math.sqrt(fan_in)
    weight = jax.random.uniform(kw, (C, C, 3, 3), jnp.float32, -bound, bound)
    bias = jax.random.uniform(kb, (C,), jnp.float32, -bound, bound)

    out = jax.block_until_ready(emu3_downsample(x, weight, bias))
    ref = jax.block_until_ready(_reference_nchw(x, weight, bias))

    assert out.shape == (N, C, H // 2, W // 2), out.shape
    err = float(jnp.max(jnp.abs(out - ref)))
    assert err < 1e-4, f"max abs err {err}"

    # Also exercise the preferred NHWC entry point.
    out_nhwc = jax.block_until_ready(
        emu3_downsample_nhwc(jnp.transpose(x, (0, 2, 3, 1)), weight, bias))
    err2 = float(jnp.max(jnp.abs(jnp.transpose(out_nhwc, (0, 3, 1, 2)) - ref)))
    assert err2 < 1e-4, f"max abs err (nhwc) {err2}"

    print("KERNEL_OK")
</pallas_src>

<mosaic_0001>
module attributes {stable_mosaic.version = 11 : i64} {
  func.func @_downsample_kernel(%arg0: i32, %arg1: i32, %arg2: memref<1x8x1x16x8xf32, #tpu.memory_space<vmem>>, %arg3: memref<1x8x1x16x8xf32, #tpu.memory_space<vmem>>, %arg4: memref<1x1x1x16x8xf32, #tpu.memory_space<vmem>>, %arg5: memref<8x16xf32, #tpu.memory_space<vmem>>, %arg6: memref<8x8xf32, #tpu.memory_space<vmem>>, %arg7: memref<1x4xf32, #tpu.memory_space<vmem>>, %arg8: memref<1x8x8x4xf32, #tpu.memory_space<vmem>>) attributes {dimension_semantics = [#tpu.dimension_semantics<parallel>, #tpu.dimension_semantics<parallel>], iteration_bounds = array<i64: 2, 1>, scalar_prefetch = 0 : i64, scratch_operands = 0 : i64, tpu.core_type = #tpu.core_type<tc>, window_params = [{transform_indices = @transform_0, window_bounds = array<i64: 1, 8, 1, 16, 8>}, {transform_indices = @transform_1, window_bounds = array<i64: 1, 8, 1, 16, 8>}, {transform_indices = @transform_2, window_bounds = array<i64: 1, 1, 1, 16, 8>}, {pipeline_mode = #tpu.pipeline_mode<synchronous>, transform_indices = @transform_3, window_bounds = array<i64: 8, 16>}, {pipeline_mode = #tpu.pipeline_mode<synchronous>, transform_indices = @transform_4, window_bounds = array<i64: 8, 8>}, {pipeline_mode = #tpu.pipeline_mode<synchronous>, transform_indices = @transform_5, window_bounds = array<i64: 1, 4>}, {transform_indices = @transform_6, window_bounds = array<i64: 1, 8, 8, 4>}]} {
    %c0 = arith.constant 0 : index
    %c0_0 = arith.constant 0 : index
    %c0_1 = arith.constant 0 : index
    %c0_2 = arith.constant 0 : index
    %c0_3 = arith.constant 0 : index
    %0 = vector.load %arg2[%c0, %c0_0, %c0_1, %c0_2, %c0_3] : memref<1x8x1x16x8xf32, #tpu.memory_space<vmem>>, vector<1x8x1x16x8xf32>
    %1 = vector.shape_cast %0 : vector<1x8x1x16x8xf32> to vector<128x8xf32>
    %c0_4 = arith.constant 0 : index
    %c0_5 = arith.constant 0 : index
    %c0_6 = arith.constant 0 : index
    %c0_7 = arith.constant 0 : index
    %c0_8 = arith.constant 0 : index
    %2 = vector.load %arg3[%c0_4, %c0_5, %c0_6, %c0_7, %c0_8] : memref<1x8x1x16x8xf32, #tpu.memory_space<vmem>>, vector<1x8x1x16x8xf32>
    %3 = vector.shape_cast %2 : vector<1x8x1x16x8xf32> to vector<128x8xf32>
    %c0_9 = arith.constant 0 : index
    %c0_10 = arith.constant 0 : index
    %c0_11 = arith.constant 0 : index
    %c0_12 = arith.constant 0 : index
    %c0_13 = arith.constant 0 : index
    %4 = vector.load %arg4[%c0_9, %c0_10, %c0_11, %c0_12, %c0_13] : memref<1x1x1x16x8xf32, #tpu.memory_space<vmem>>, vector<1x1x1x16x8xf32>
    %5 = vector.shape_cast %4 : vector<1x1x1x16x8xf32> to vector<16x8xf32>
    %c0_14 = arith.constant 0 : index
    %c0_15 = arith.constant 0 : index
    %6 = vector.load %arg5[%c0_14, %c0_15] : memref<8x16xf32, #tpu.memory_space<vmem>>, vector<8x16xf32>
    %cst = arith.constant dense<0.000000e+00> : vector<128x16xf32>
    %7 = tpu.matmul %1, %6, %cst {dimension_numbers = #tpu.dot_dimension_numbers<[1], [0], [0], [1], [0, 0, 1, 1], [], []>} : vector<128x8xf32>, vector<8x16xf32>, vector<128x16xf32> -> vector<128x16xf32>
    %c0_16 = arith.constant 0 : index
    %c0_17 = arith.constant 0 : index
    %8 = vector.load %arg6[%c0_16, %c0_17] : memref<8x8xf32, #tpu.memory_space<vmem>>, vector<8x8xf32>
    %cst_18 = arith.constant dense<0.000000e+00> : vector<128x8xf32>
    %9 = tpu.matmul %3, %8, %cst_18 {dimension_numbers = #tpu.dot_dimension_numbers<[1], [0], [0], [1], [0, 0, 1, 1], [], []>} : vector<128x8xf32>, vector<8x8xf32>, vector<128x8xf32> -> vector<128x8xf32>
    %c0_19 = arith.constant 0 : index
    %c0_20 = arith.constant 0 : index
    %10 = vector.load %arg5[%c0_19, %c0_20] : memref<8x16xf32, #tpu.memory_space<vmem>>, vector<8x16xf32>
    %cst_21 = arith.constant dense<0.000000e+00> : vector<16x16xf32>
    %11 = tpu.matmul %5, %10, %cst_21 {dimension_numbers = #tpu.dot_dimension_numbers<[1], [0], [0], [1], [0, 0, 1, 1], [], []>} : vector<16x8xf32>, vector<8x16xf32>, vector<16x16xf32> -> vector<16x16xf32>
    %c0_22 = arith.constant 0 : index
    %c0_23 = arith.constant 0 : index
    %12 = vector.load %arg7[%c0_22, %c0_23] : memref<1x4xf32, #tpu.memory_space<vmem>>, vector<1x4xf32>
    %13 = vector.extract_strided_slice %7 {offsets = [0, 0], sizes = [128, 4], strides = [1, 1]} : vector<128x16xf32> to vector<128x4xf32>
    %14 = vector.extract_strided_slice %9 {offsets = [0, 0], sizes = [128, 4], strides = [1, 1]} : vector<128x8xf32> to vector<128x4xf32>
    %15 = arith.addf %13, %14 : vector<128x4xf32>
    %16 = vector.broadcast %12 : vector<1x4xf32> to vector<128x4xf32>
    %17 = arith.addf %15, %16 : vector<128x4xf32>
    %18 = vector.shape_cast %17 : vector<128x4xf32> to vector<8x16x4xf32>
    %19 = vector.extract_strided_slice %7 {offsets = [0, 8], sizes = [128, 4], strides = [1, 1]} : vector<128x16xf32> to vector<128x4xf32>
    %20 = vector.extract_strided_slice %9 {offsets = [0, 4], sizes = [128, 4], strides = [1, 1]} : vector<128x8xf32> to vector<128x4xf32>
    %21 = arith.addf %19, %20 : vector<128x4xf32>
    %22 = vector.shape_cast %21 : vector<128x4xf32> to vector<8x16x4xf32>
    %23 = vector.extract_strided_slice %7 {offsets = [0, 4], sizes = [128, 4], strides = [1, 1]} : vector<128x16xf32> to vector<128x4xf32>
    %24 = vector.shape_cast %23 : vector<128x4xf32> to vector<8x16x4xf32>
    %25 = vector.extract_strided_slice %7 {offsets = [0, 12], sizes = [128, 4], strides = [1, 1]} : vector<128x16xf32> to vector<128x4xf32>
    %26 = vector.shape_cast %25 : vector<128x4xf32> to vector<8x16x4xf32>
    %27 = vector.extract_strided_slice %11 {offsets = [0, 4], sizes = [16, 4], strides = [1, 1]} : vector<16x16xf32> to vector<16x4xf32>
    %28 = vector.extract_strided_slice %11 {offsets = [0, 12], sizes = [16, 4], strides = [1, 1]} : vector<16x16xf32> to vector<16x4xf32>
    %29 = vector.extract_strided_slice %18 {offsets = [0, 0, 0], sizes = [7, 8, 4], strides = [1, 1, 1]} : vector<8x16x4xf32> to vector<7x8x4xf32>
    %30 = vector.extract_strided_slice %22 {offsets = [0, 1, 0], sizes = [7, 8, 4], strides = [1, 1, 1]} : vector<8x16x4xf32> to vector<7x8x4xf32>
    %31 = arith.addf %29, %30 : vector<7x8x4xf32>
    %32 = vector.extract_strided_slice %24 {offsets = [1, 0, 0], sizes = [7, 8, 4], strides = [1, 1, 1]} : vector<8x16x4xf32> to vector<7x8x4xf32>
    %33 = arith.addf %31, %32 : vector<7x8x4xf32>
    %34 = vector.extract_strided_slice %26 {offsets = [1, 1, 0], sizes = [7, 8, 4], strides = [1, 1, 1]} : vector<8x16x4xf32> to vector<7x8x4xf32>
    %35 = arith.addf %33, %34 : vector<7x8x4xf32>
    %c0_24 = arith.constant 0 : index
    %c0_25 = arith.constant 0 : index
    %c0_26 = arith.constant 0 : index
    %c0_27 = arith.constant 0 : index
    %36 = vector.load %arg8[%c0_24, %c0_25, %c0_26, %c0_27] : memref<1x8x8x4xf32, #tpu.memory_space<vmem>>, vector<1x7x8x4xf32>
    %37 = vector.shape_cast %36 : vector<1x7x8x4xf32> to vector<7x8x4xf32>
    %38 = vector.shape_cast %35 : vector<7x8x4xf32> to vector<1x7x8x4xf32>
    tpu.vector_store %arg8[%c0_24, %c0_25, %c0_26, %c0_27], %38 {strides = array<i32>} : memref<1x8x8x4xf32, #tpu.memory_space<vmem>>, vector<1x7x8x4xf32>,
    %39 = vector.extract_strided_slice %18 {offsets = [7, 0, 0], sizes = [1, 8, 4], strides = [1, 1, 1]} : vector<8x16x4xf32> to vector<1x8x4xf32>
    %40 = vector.shape_cast %39 : vector<1x8x4xf32> to vector<8x4xf32>
    %41 = vector.extract_strided_slice %22 {offsets = [7, 1, 0], sizes = [1, 8, 4], strides = [1, 1, 1]} : vector<8x16x4xf32> to vector<1x8x4xf32>
    %42 = vector.shape_cast %41 : vector<1x8x4xf32> to vector<8x4xf32>
    %43 = arith.addf %40, %42 : vector<8x4xf32>
    %44 = vector.extract_strided_slice %27 {offsets = [0, 0], sizes = [8, 4], strides = [1, 1]} : vector<16x4xf32> to vector<8x4xf32>
    %45 = arith.addf %43, %44 : vector<8x4xf32>
    %46 = vector.extract_strided_slice %28 {offsets = [1, 0], sizes = [8, 4], strides = [1, 1]} : vector<16x4xf32> to vector<8x4xf32>
    %47 = arith.addf %45, %46 : vector<8x4xf32>
    %c0_28 = arith.constant 0 : index
    %c7 = arith.constant 7 : index
    %c0_29 = arith.constant 0 : index
    %c0_30 = arith.constant 0 : index
    %48 = vector.load %arg8[%c0_28, %c7, %c0_29, %c0_30] : memref<1x8x8x4xf32, #tpu.memory_space<vmem>>, vector<1x1x8x4xf32>
    %49 = vector.shape_cast %48 : vector<1x1x8x4xf32> to vector<8x4xf32>
    %50 = vector.shape_cast %47 : vector<8x4xf32> to vector<1x1x8x4xf32>
    tpu.vector_store %arg8[%c0_28, %c7, %c0_29, %c0_30], %50 {strides = array<i32>} : memref<1x8x8x4xf32, #tpu.memory_space<vmem>>, vector<1x1x8x4xf32>,
    return
  }
  func.func @transform_0(%arg0: i32, %arg1: i32) -> (i32, i32, i32, i32, i32) {
    %c0_i32 = arith.constant 0 : i32
    %c0_i32_0 = arith.constant 0 : i32
    %c0_i32_1 = arith.constant 0 : i32
    %c0_i32_2 = arith.constant 0 : i32
    return %arg0, %arg1, %c0_i32, %c0_i32_0, %c0_i32_1 : i32, i32, i32, i32, i32
  }
  func.func @transform_1(%arg0: i32, %arg1: i32) -> (i32, i32, i32, i32, i32) {
    %c1_i32 = arith.constant 1 : i32
    %c0_i32 = arith.constant 0 : i32
    %c0_i32_0 = arith.constant 0 : i32
    %c0_i32_1 = arith.constant 0 : i32
    return %arg0, %arg1, %c1_i32, %c0_i32, %c0_i32_0 : i32, i32, i32, i32, i32
  }
  func.func @transform_2(%arg0: i32, %arg1: i32) -> (i32, i32, i32, i32, i32) {
    %c1_i32 = arith.constant 1 : i32
    %0 = arith.addi %arg1, %c1_i32 : i32
    %c8_i32 = arith.constant 8 : i32
    %1 = arith.muli %0, %c8_i32 : i32
    %c0_i32 = arith.constant 0 : i32
    %c0_i32_0 = arith.constant 0 : i32
    %c0_i32_1 = arith.constant 0 : i32
    %c0_i32_2 = arith.constant 0 : i32
    return %arg0, %1, %c0_i32, %c0_i32_0, %c0_i32_1 : i32, i32, i32, i32, i32
  }
  func.func @transform_3(%arg0: i32, %arg1: i32) -> (i32, i32) {
    %c0_i32 = arith.constant 0 : i32
    %c0_i32_0 = arith.constant 0 : i32
    %c0_i32_1 = arith.constant 0 : i32
    return %c0_i32, %c0_i32_0 : i32, i32
  }
  func.func @transform_4(%arg0: i32, %arg1: i32) -> (i32, i32) {
    %c0_i32 = arith.constant 0 : i32
    %c0_i32_0 = arith.constant 0 : i32
    %c0_i32_1 = arith.constant 0 : i32
    return %c0_i32, %c0_i32_0 : i32, i32
  }
  func.func @transform_5(%arg0: i32, %arg1: i32) -> (i32, i32) {
    %c0_i32 = arith.constant 0 : i32
    %c0_i32_0 = arith.constant 0 : i32
    %c0_i32_1 = arith.constant 0 : i32
    return %c0_i32, %c0_i32_0 : i32, i32
  }
  func.func @transform_6(%arg0: i32, %arg1: i32) -> (i32, i32, i32, i32) {
    %c0_i32 = arith.constant 0 : i32
    %c0_i32_0 = arith.constant 0 : i32
    %c0_i32_1 = arith.constant 0 : i32
    return %arg0, %arg1, %c0_i32, %c0_i32_0 : i32, i32, i32, i32
  }
}

</mosaic_0001>

<llo_original>
// kernel: emu3_downsample_nhwc.1
$region0: #{emu3_downsample_nhwc.1}
  #allocation0 [shape = 'u32[]', space=smem, size = 0x4, offset = 0x4, fixed_abs, tag = 'smem constant byte address 0x4 - core index']
  #allocation1 [shape = 'u32[72,128]{1,0:T(1,128)}', space=vmem, size = 0x9000, scoped, tag = 'internal scratch']
  %s0 = inlined_call_operand.vmem [shape: f32[2,9,2,16,8], index: 0, kind: input, shape index: {}, may-alias: {0,1,2}]
  %s1 = inlined_call_operand.vmem [shape: f32[2,9,2,16,8], index: 1, kind: input, shape index: {}, may-alias: {0,1,2}]
  %s2 = inlined_call_operand.vmem [shape: f32[2,9,2,16,8], index: 2, kind: input, shape index: {}, may-alias: {0,1,2}]
  %s3 = inlined_call_operand.vmem [shape: f32[8,16], index: 3, kind: input, shape index: {}]
  %s4 = inlined_call_operand.vmem [shape: f32[8,8], index: 4, kind: input, shape index: {}]
  %s5 = inlined_call_operand.vmem [shape: f32[1,4], index: 5, kind: input, shape index: {}]
  %s6 = inlined_call_operand.vmem [shape: f32[2,8,8,4], index: 6, kind: output, shape index: {}]
  %s7 = sld [smem:[#allocation0]]
  $region161: #{emu3_downsample_nhwc.1} parent=0
    _
  %s9 = ssub.s32 1, %s7
  %s10 = scalar_select 0, %s9, %s7
  $region1: #{emu3_downsample_nhwc.1} parent=0
    #allocation2 [shape = 'u8[131072]{0}', space=vmem, size = 0x20000, scoped, tag = 'input window, operand 0']
    #allocation3 [shape = 'u8[131072]{0}', space=vmem, size = 0x20000, scoped, tag = 'input window, operand 1']
    loop: start=0, step=1, limit=4
    $region2: #{emu3_downsample_nhwc.1} parent=1 // loop_pre_header
      _
    $region3: #{emu3_downsample_nhwc.1} parent=1 // loop_header
      %s12 = sphi 0, %s16
      %p13 = scmp.ge.s32.totalorder %s12, 4
      %s19 = sphi 0, %s31
      %s20 = sphi 0, %s27
      %s21 = sphi 0, %s19
      %s22 = sphi 0, %s20
      %s23 = sphi 0, %s21
      %s24 = sphi 0, %s22
      %s36 = sphi 0, %s38
      %s39 = sphi 0, %s36
      %s40 = sphi 0, %s39
      %s56 = sphi 0, %s40
      %s64 = sphi 0, %s66
      %s67 = sphi 0, %s64
      %s68 = sphi 0, %s67
      %s84 = sphi 0, %s68
      %s96 = sphi 0, %s98
      %s99 = sphi 0, %s96
      %s100 = sphi 0, %s99
      %s116 = sphi 0, %s100
      %s120 = sphi 0, %s120
      %s122 = sphi 0, %s120
      %s123 = sphi 0, %s122
      %s137 = sphi 0, %s123
      %s141 = sphi 0, %s141
      %s143 = sphi 0, %s141
      %s144 = sphi 0, %s143
      %s158 = sphi 0, %s144
      %s162 = sphi 0, %s162
      %s164 = sphi 0, %s162
      %s165 = sphi 0, %s164
      %s179 = sphi 0, %s165
      %s187 = sphi 0, %s189
      %s190 = sphi 0, %s187
      %s191 = sphi 0, %s190
      %s207 = sphi 0, %s191
    $region4: #{emu3_downsample_nhwc.1} parent=1 // loop_header_branch
      %15 = sbr.rel (%p13) target = $region8
    $region5: #{emu3_downsample_nhwc.1} parent=1 // loop_body
      %s17 = ssub.s32 %s12, 1
      %s18 = ssub.s32 %s12, 2
      %s25 = sadd.s32 1, %s20
      %p26 = scmp.ge.s32.totalorder %s25, 1
      %s27 = scalar_select %p26, 0, %s25
      %s28 = sadd.s32 1, %s19
      %s29 = scalar_select %p26, %s28, %s19
      %p30 = scmp.ge.s32.totalorder %s29, 2
      %s31 = scalar_select %p30, 0, %s29
      %s32 = ssub.s32 %s19, %s31
      %s33 = ssub.s32 %s20, %s27
      %s34 = sor.u32 %s32, %s33
      %p35 = scmp.eq.s32.totalorder %s34, 0
      %s37 = sadd.s32 %s36, 1
      %s38 = scalar_select %p35, %s36, %s37
      %p41 = pneg %p35
      %p42 = scmp.eq.s32.totalorder %s12, 1
      %p43 = por %p41, %p42
      %p44 = scmp.ne.s32.totalorder %s36, %s39
      %p45 = scmp.eq.s32.totalorder %s12, 0
      %p46 = por %p44, %p45
      %p47 = scmp.ne.s32.totalorder %s36, %s39
      %p48 = scmp.eq.s32.totalorder %s17, 1
      %p49 = por %p47, %p48
      %p50 = scmp.ne.s32.totalorder %s39, %s40
      %p51 = scmp.eq.s32.totalorder %s17, 0
      %p52 = por %p50, %p51
      %p53 = scmp.ne.s32.totalorder %s39, %s40
      %p54 = scmp.eq.s32.totalorder %s18, 1
      %p55 = por %p53, %p54
      %p57 = scmp.ne.s32.totalorder %s40, %s56
      %p58 = scmp.eq.s32.totalorder %s18, 0
      %p59 = por %p57, %p58
      %s60 = ssub.s32 %s19, %s31
      %s61 = ssub.s32 %s20, %s27
      %s62 = sor.u32 %s60, %s61
      %p63 = scmp.eq.s32.totalorder %s62, 0
      %s65 = sadd.s32 %s64, 1
      %s66 = scalar_select %p63, %s64, %s65
      %p69 = pneg %p63
      %p70 = scmp.eq.s32.totalorder %s12, 1
      %p71 = por %p69, %p70
      %p72 = scmp.ne.s32.totalorder %s64, %s67
      %p73 = scmp.eq.s32.totalorder %s12, 0
      %p74 = por %p72, %p73
      %p75 = scmp.ne.s32.totalorder %s64, %s67
      %p76 = scmp.eq.s32.totalorder %s17, 1
      %p77 = por %p75, %p76
      %p78 = scmp.ne.s32.totalorder %s67, %s68
      %p79 = scmp.eq.s32.totalorder %s17, 0
      %p80 = por %p78, %p79
      %p81 = scmp.ne.s32.totalorder %s67, %s68
      %p82 = scmp.eq.s32.totalorder %s18, 1
      %p83 = por %p81, %p82
      %p85 = scmp.ne.s32.totalorder %s68, %s84
      %p86 = scmp.eq.s32.totalorder %s18, 0
      %p87 = por %p85, %p86
      %s88 = sadd.s32 %s20, 1
      %s89 = smul.u32 %s88, 8
      %s90 = sadd.s32 %s27, 1
      %s91 = smul.u32 %s90, 8
      %s92 = ssub.s32 %s19, %s31
      %s93 = ssub.s32 %s89, %s91
      %s94 = sor.u32 %s92, %s93
      %p95 = scmp.eq.s32.totalorder %s94, 0
      %s97 = sadd.s32 %s96, 1
      %s98 = scalar_select %p95, %s96, %s97
      %p101 = pneg %p95
      %p102 = scmp.eq.s32.totalorder %s12, 1
      %p103 = por %p101, %p102
      %p104 = scmp.ne.s32.totalorder %s96, %s99
      %p105 = scmp.eq.s32.totalorder %s12, 0
      %p106 = por %p104, %p105
      %p107 = scmp.ne.s32.totalorder %s96, %s99
      %p108 = scmp.eq.s32.totalorder %s17, 1
      %p109 = por %p107, %p108
      %p110 = scmp.ne.s32.totalorder %s99, %s100
      %p111 = scmp.eq.s32.totalorder %s17, 0
      %p112 = por %p110, %p111
      %p113 = scmp.ne.s32.totalorder %s99, %s100
      %p114 = scmp.eq.s32.totalorder %s18, 1
      %p115 = por %p113, %p114
      %p117 = scmp.ne.s32.totalorder %s100, %s116
      %p118 = scmp.eq.s32.totalorder %s18, 0
      %p119 = por %p117, %p118
      %s121 = sadd.s32 %s120, 1
      %p124 = scmp.eq.s32.totalorder %s12, 1
      %p125 = scmp.ne.s32.totalorder %s120, %s122
      %p126 = scmp.eq.s32.totalorder %s12, 0
      %p127 = por %p125, %p126
      %p128 = scmp.ne.s32.totalorder %s120, %s122
      %p129 = scmp.eq.s32.totalorder %s17, 1
      %p130 = por %p128, %p129
      %p131 = scmp.ne.s32.totalorder %s122, %s123
      %p132 = scmp.eq.s32.totalorder %s17, 0
      %p133 = por %p131, %p132
      %p134 = scmp.ne.s32.totalorder %s122, %s123
      %p135 = scmp.eq.s32.totalorder %s18, 1
      %p136 = por %p134, %p135
      %p138 = scmp.ne.s32.totalorder %s123, %s137
      %p139 = scmp.eq.s32.totalorder %s18, 0
      %p140 = por %p138, %p139
      %s142 = sadd.s32 %s141, 1
      %p145 = scmp.eq.s32.totalorder %s12, 1
      %p146 = scmp.ne.s32.totalorder %s141, %s143
      %p147 = scmp.eq.s32.totalorder %s12, 0
      %p148 = por %p146, %p147
      %p149 = scmp.ne.s32.totalorder %s141, %s143
      %p150 = scmp.eq.s32.totalorder %s17, 1
      %p151 = por %p149, %p150
      %p152 = scmp.ne.s32.totalorder %s143, %s144
      %p153 = scmp.eq.s32.totalorder %s17, 0
      %p154 = por %p152, %p153
      %p155 = scmp.ne.s32.totalorder %s143, %s144
      %p156 = scmp.eq.s32.totalorder %s18, 1
      %p157 = por %p155, %p156
      %p159 = scmp.ne.s32.totalorder %s144, %s158
      %p160 = scmp.eq.s32.totalorder %s18, 0
      %p161 = por %p159, %p160
      %s163 = sadd.s32 %s162, 1
      %p166 = scmp.eq.s32.totalorder %s12, 1
      %p167 = scmp.ne.s32.totalorder %s162, %s164
      %p168 = scmp.eq.s32.totalorder %s12, 0
      %p169 = por %p167, %p168
      %p170 = scmp.ne.s32.totalorder %s162, %s164
      %p171 = scmp.eq.s32.totalorder %s17, 1
      %p172 = por %p170, %p171
      %p173 = scmp.ne.s32.totalorder %s164, %s165
      %p174 = scmp.eq.s32.totalorder %s17, 0
      %p175 = por %p173, %p174
      %p176 = scmp.ne.s32.totalorder %s164, %s165
      %p177 = scmp.eq.s32.totalorder %s18, 1
      %p178 = por %p176, %p177
      %p180 = scmp.ne.s32.totalorder %s165, %s179
      %p181 = scmp.eq.s32.totalorder %s18, 0
      %p182 = por %p180, %p181
      %s183 = ssub.s32 %s19, %s31
      %s184 = ssub.s32 %s20, %s27
      %s185 = sor.u32 %s183, %s184
      %p186 = scmp.eq.s32.totalorder %s185, 0
      %s188 = sadd.s32 %s187, 1
      %s189 = scalar_select %p186, %s187, %s188
      %p192 = pneg %p186
      %p193 = scmp.eq.s32.totalorder %s12, 1
      %p194 = por %p192, %p193
      %p195 = scmp.ne.s32.totalorder %s187, %s190
      %p196 = scmp.eq.s32.totalorder %s12, 0
      %p197 = por %p195, %p196
      %p198 = scmp.ne.s32.totalorder %s187, %s190
      %p199 = scmp.eq.s32.totalorder %s17, 1
      %p200 = por %p198, %p199
      %p201 = scmp.ne.s32.totalorder %s190, %s191
      %p202 = scmp.eq.s32.totalorder %s17, 0
      %p203 = por %p201, %p202
      %p204 = scmp.ne.s32.totalorder %s190, %s191
      %p205 = scmp.eq.s32.totalorder %s18, 1
      %p206 = por %p204, %p205
      %p208 = scmp.ne.s32.totalorder %s191, %s207
      %p209 = scmp.eq.s32.totalorder %s18, 0
      %p210 = por %p208, %p209
      %p211 = scmp.le.s32.totalorder 1, %s12
      %p212 = scmp.lt.s32.totalorder %s12, 3
      %p213 = pnand %p211, %p212
      %p214 = pneg %p213
      // Predicated region
      $region9: #{emu3_downsample_nhwc.1} parent=5 // pred_check
        _
      $region10: #{emu3_downsample_nhwc.1} parent=5 // pred_check_branch
        %216 = sbr.rel (%p213) target = $region12
      $region11: #{emu3_downsample_nhwc.1} parent=5 // pred_region
        %s217 = ssub.s32 %s12, 1
        // Predicated region
        $region13: #{emu3_downsample_nhwc.1} parent=11 // pred_check
          %p218 = pneg %p133
        $region14: #{emu3_downsample_nhwc.1} parent=11 // pred_check_branch
          %220 = sbr.rel (%p218) target = $region16
        $region15: #{emu3_downsample_nhwc.1} parent=11 // pred_region
          _
        $region16: #{emu3_downsample_nhwc.1} parent=11 // pred_fallthru
          _
        // Predicated region
        $region17: #{emu3_downsample_nhwc.1} parent=11 // pred_check
          %p221 = pneg %p154
        $region18: #{emu3_downsample_nhwc.1} parent=11 // pred_check_branch
          %223 = sbr.rel (%p221) target = $region20
        $region19: #{emu3_downsample_nhwc.1} parent=11 // pred_region
          _
        $region20: #{emu3_downsample_nhwc.1} parent=11 // pred_fallthru
          _
        // Predicated region
        $region21: #{emu3_downsample_nhwc.1} parent=11 // pred_check
          %p224 = pneg %p175
        $region22: #{emu3_downsample_nhwc.1} parent=11 // pred_check_branch
          %226 = sbr.rel (%p224) target = $region24
        $region23: #{emu3_downsample_nhwc.1} parent=11 // pred_region
          _
        $region24: #{emu3_downsample_nhwc.1} parent=11 // pred_fallthru
          _
      $region12: #{emu3_downsample_nhwc.1} parent=5 // pred_fallthru
        _
      %p227 = scmp.lt.s32.totalorder %s12, 2
      // Predicated region
      $region25: #{emu3_downsample_nhwc.1} parent=5 // pred_check
        %p228 = pneg %p227
      $region26: #{emu3_downsample_nhwc.1} parent=5 // pred_check_branch
        %230 = sbr.rel (%p228) target = $region28
      $region27: #{emu3_downsample_nhwc.1} parent=5 // pred_region
        // Predicated region
        $region29: #{emu3_downsample_nhwc.1} parent=27 // pred_check
          %p231 = pneg %p46
        $region30: #{emu3_downsample_nhwc.1} parent=27 // pred_check_branch
          %233 = sbr.rel (%p231) target = $region32
        $region31: #{emu3_downsample_nhwc.1} parent=27 // pred_region
          %s234 = sand.u32 %s36, 1
          %s235 = sand.u32 %s36, 1
          %s236 = smul.addr %s235, 128
          %s237 = scalar_lea.vmem [#allocation2], %s236
          %s238 = smul.u32 8, %s20
          %s239 = ssub.s32 9, %s238
          %p240 = scmp.lt.s32.totalorder %s239, 8
          %s241 = scalar_select %p240, %s239, 8
          %s242 = smul.u32 8, %s241
          %s243 = smul.u32 %s242, 2
          %p244 = scmp.ne.s32.totalorder 0, %s243
          %s245 = smul.addr %s238, 4
          %s246 = smul.addr %s19, 36
          %s247 = sadd.s32 %s245, %s246
          %s248 = smul.addr %s247, 8
          %s249 = scalar_lea.vmem %s0, %s248
          // Predicated region
          $region33: #{emu3_downsample_nhwc.1} parent=31 // pred_check
            %p250 = pneg %p244
          $region34: #{emu3_downsample_nhwc.1} parent=31 // pred_check_branch
            %252 = sbr.rel (%p250) target = $region36
          $region35: #{emu3_downsample_nhwc.1} parent=31 // pred_region
            // Predicated region
            $region37: #{emu3_downsample_nhwc.1} parent=35 // pred_check
              _
            $region38: #{emu3_downsample_nhwc.1} parent=35 // pred_check_branch
              %254 = sbr.rel (0) target = $region40
            $region39: #{emu3_downsample_nhwc.1} parent=35 // pred_region
              // Predicated region
              $region59: #{emu3_downsample_nhwc.1} parent=39 // pred_check
                _
              $region60: #{emu3_downsample_nhwc.1} parent=39 // pred_check_branch
                %336 = sbr.rel (0) target = $region62
              $region61: #{emu3_downsample_nhwc.1} parent=39 // pred_region
                %s337 = sshrl.u32 %s241, 3
                // While loop
                $region63: #{emu3_downsample_nhwc.1} parent=61 // loop_pre_header
                  _
                $region64: #{emu3_downsample_nhwc.1} parent=61 // loop_header
                  %s339 = sphi 0, %s341
                  %p340 = scmp.ge.s32.totalorder %s339, %s337
                  %s344 = sphi 0, %s381
                  %s345 = sphi %s249, %s384
                  %s346 = sphi %s237, %s385
                $region65: #{emu3_downsample_nhwc.1} parent=61 // loop_header_branch
                  %343 = sbr.rel (%p340) target = $region69
                $region66: #{emu3_downsample_nhwc.1} parent=61 // loop_body
                  %v347 = vld [vmem:[%s345] sm:$0xff]
                  %348 = vst [vmem:[%s346] sm:$0xff] %v347
                  %v349 = vld [vmem:[%s345 + $0x20] sm:$0xff]
                  %350 = vst [vmem:[%s346 + $0x10] sm:$0xff] %v349
                  %v351 = vld [vmem:[%s345 + $0x40] sm:$0xff]
                  %352 = vst [vmem:[%s346 + $0x20] sm:$0xff] %v351
                  %v353 = vld [vmem:[%s345 + $0x60] sm:$0xff]
                  %354 = vst [vmem:[%s346 + $0x30] sm:$0xff] %v353
                  %v355 = vld [vmem:[%s345 + $0x80] sm:$0xff]
                  %356 = vst [vmem:[%s346 + $0x40] sm:$0xff] %v355
                  %v357 = vld [vmem:[%s345 + $0xa0] sm:$0xff]
                  %358 = vst [vmem:[%s346 + $0x50] sm:$0xff] %v357
                  %v359 = vld [vmem:[%s345 + $0xc0] sm:$0xff]
                  %360 = vst [vmem:[%s346 + $0x60] sm:$0xff] %v359
                  %v361 = vld [vmem:[%s345 + $0xe0] sm:$0xff]
                  %362 = vst [vmem:[%s346 + $0x70] sm:$0xff] %v361
                  %v363 = vld [vmem:[%s345 + $0x8] sm:$0xff]
                  %364 = vst [vmem:[%s346 + $0x8] sm:$0xff] %v363
                  %v365 = vld [vmem:[%s345 + $0x28] sm:$0xff]
                  %366 = vst [vmem:[%s346 + $0x18] sm:$0xff] %v365
                  %v367 = vld [vmem:[%s345 + $0x48] sm:$0xff]
                  %368 = vst [vmem:[%s346 + $0x28] sm:$0xff] %v367
                  %v369 = vld [vmem:[%s345 + $0x68] sm:$0xff]
                  %370 = vst [vmem:[%s346 + $0x38] sm:$0xff] %v369
                  %v371 = vld [vmem:[%s345 + $0x88] sm:$0xff]
                  %372 = vst [vmem:[%s346 + $0x48] sm:$0xff] %v371
                  %v373 = vld [vmem:[%s345 + $0xa8] sm:$0xff]
                  %374 = vst [vmem:[%s346 + $0x58] sm:$0xff] %v373
                  %v375 = vld [vmem:[%s345 + $0xc8] sm:$0xff]
                  %376 = vst [vmem:[%s346 + $0x68] sm:$0xff] %v375
                  %v377 = vld [vmem:[%s345 + $0xe8] sm:$0xff]
                  %378 = vst [vmem:[%s346 + $0x78] sm:$0xff] %v377
                  %s379 = sadd.s32 1, %s344
                  %p380 = scmp.ge.s32.totalorder %s379, %s337
                  %s381 = scalar_select %p380, 0, %s379
                  %s382 = smul.u32 %s381, 256
                  %s383 = smul.u32 %s381, 128
                  %s384 = scalar_lea.vmem %s249, %s382
                  %s385 = scalar_lea.vmem %s237, %s383 [#allocation2]
                $region67: #{emu3_downsample_nhwc.1} parent=61 // loop_footer
                  %s341 = sadd.s32 %s339, 1
                $region68: #{emu3_downsample_nhwc.1} parent=61 // loop_footer_branch
                  %338 = sbr.rel target = $region64
                $region69: #{emu3_downsample_nhwc.1} parent=61 // loop_exit
                  _
                %s386 = sshrl.u32 %s241, 3
                %s387 = sand.u32 %s241, 7
                %s388 = smul.u32 %s386, 8
                %s389 = smul.u32 32, %s388
                %s390 = scalar_lea.vmem %s249, %s389
                %s391 = smul.u32 16, %s388
                %s392 = scalar_lea.vmem %s237, %s391 [#allocation2]
                // While loop
                $region70: #{emu3_downsample_nhwc.1} parent=61 // loop_pre_header
                  _
                $region71: #{emu3_downsample_nhwc.1} parent=61 // loop_header
                  %s394 = sphi 0, %s396
                  %p395 = scmp.ge.s32.totalorder %s394, %s387
                  %s399 = sphi 0, %s408
                  %s400 = sphi %s390, %s411
                  %s401 = sphi %s392, %s412
                $region72: #{emu3_downsample_nhwc.1} parent=61 // loop_header_branch
                  %398 = sbr.rel (%p395) target = $region76
                $region73: #{emu3_downsample_nhwc.1} parent=61 // loop_body
                  %v402 = vld [vmem:[%s400] sm:$0xff]
                  %403 = vst [vmem:[%s401] sm:$0xff] %v402
                  %v404 = vld [vmem:[%s400 + $0x8] sm:$0xff]
                  %405 = vst [vmem:[%s401 + $0x8] sm:$0xff] %v404
                  %s406 = sadd.s32 1, %s399
                  %p407 = scmp.ge.s32.totalorder %s406, %s387
                  %s408 = scalar_select %p407, 0, %s406
                  %s409 = smul.u32 %s408, 32
                  %s410 = smul.u32 %s408, 16
                  %s411 = scalar_lea.vmem %s390, %s409
                  %s412 = scalar_lea.vmem %s392, %s410 [#allocation2]
                $region74: #{emu3_downsample_nhwc.1} parent=61 // loop_footer
                  %s396 = sadd.s32 %s394, 1
                $region75: #{emu3_downsample_nhwc.1} parent=61 // loop_footer_branch
                  %393 = sbr.rel target = $region71
                $region76: #{emu3_downsample_nhwc.1} parent=61 // loop_exit
                  _
              $region62: #{emu3_downsample_nhwc.1} parent=39 // pred_fallthru
                _
              // Predicated region
              $region77: #{emu3_downsample_nhwc.1} parent=39 // pred_check
                _
              $region78: #{emu3_downsample_nhwc.1} parent=39 // pred_check_branch
                %414 = sbr.rel target = $region80
              $region79: #{emu3_downsample_nhwc.1} parent=39 // pred_region
                _
              $region80: #{emu3_downsample_nhwc.1} parent=39 // pred_fallthru
                _
            $region40: #{emu3_downsample_nhwc.1} parent=35 // pred_fallthru
              _
            // Predicated region
            $region41: #{emu3_downsample_nhwc.1} parent=35 // pred_check
              _
            $region42: #{emu3_downsample_nhwc.1} parent=35 // pred_check_branch
              %256 = sbr.rel target = $region44
            $region43: #{emu3_downsample_nhwc.1} parent=35 // pred_region
              %s258 = ssub.s32 256, 1
              %s259 = sshrl.u32 %s241, 3
              // While loop
              $region45: #{emu3_downsample_nhwc.1} parent=43 // loop_pre_header
                _
              $region46: #{emu3_downsample_nhwc.1} parent=43 // loop_header
                %s261 = sphi 0, %s263
                %p262 = scmp.ge.s32.totalorder %s261, %s259
                %s266 = sphi 0, %s303
                %s267 = sphi %s249, %s306
                %s268 = sphi %s237, %s307
              $region47: #{emu3_downsample_nhwc.1} parent=43 // loop_header_branch
                %265 = sbr.rel (%p262) target = $region51
              $region48: #{emu3_downsample_nhwc.1} parent=43 // loop_body
                %v269 = vld [vmem:[%s267] sm:%s258]
                %270 = vst [vmem:[%s268] sm:%s258] %v269
                %v271 = vld [vmem:[%s267 + $0x20] sm:%s258]
                %272 = vst [vmem:[%s268 + $0x10] sm:%s258] %v271
                %v273 = vld [vmem:[%s267 + $0x40] sm:%s258]
                %274 = vst [vmem:[%s268 + $0x20] sm:%s258] %v273
                %v275 = vld [vmem:[%s267 + $0x60] sm:%s258]
                %276 = vst [vmem:[%s268 + $0x30] sm:%s258] %v275
                %v277 = vld [vmem:[%s267 + $0x80] sm:%s258]
                %278 = vst [vmem:[%s268 + $0x40] sm:%s258] %v277
                %v279 = vld [vmem:[%s267 + $0xa0] sm:%s258]
                %280 = vst [vmem:[%s268 + $0x50] sm:%s258] %v279
                %v281 = vld [vmem:[%s267 + $0xc0] sm:%s258]
                %282 = vst [vmem:[%s268 + $0x60] sm:%s258] %v281
                %v283 = vld [vmem:[%s267 + $0xe0] sm:%s258]
                %284 = vst [vmem:[%s268 + $0x70] sm:%s258] %v283
                %v285 = vld [vmem:[%s267 + $0x8] sm:%s258]
                %286 = vst [vmem:[%s268 + $0x8] sm:%s258] %v285
                %v287 = vld [vmem:[%s267 + $0x28] sm:%s258]
                %288 = vst [vmem:[%s268 + $0x18] sm:%s258] %v287
                %v289 = vld [vmem:[%s267 + $0x48] sm:%s258]
                %290 = vst [vmem:[%s268 + $0x28] sm:%s258] %v289
                %v291 = vld [vmem:[%s267 + $0x68] sm:%s258]
                %292 = vst [vmem:[%s268 + $0x38] sm:%s258] %v291
                %v293 = vld [vmem:[%s267 + $0x88] sm:%s258]
                %294 = vst [vmem:[%s268 + $0x48] sm:%s258] %v293
                %v295 = vld [vmem:[%s267 + $0xa8] sm:%s258]
                %296 = vst [vmem:[%s268 + $0x58] sm:%s258] %v295
                %v297 = vld [vmem:[%s267 + $0xc8] sm:%s258]
                %298 = vst [vmem:[%s268 + $0x68] sm:%s258] %v297
                %v299 = vld [vmem:[%s267 + $0xe8] sm:%s258]
                %300 = vst [vmem:[%s268 + $0x78] sm:%s258] %v299
                %s301 = sadd.s32 1, %s266
                %p302 = scmp.ge.s32.totalorder %s301, %s259
                %s303 = scalar_select %p302, 0, %s301
                %s304 = smul.u32 %s303, 256
                %s305 = smul.u32 %s303, 128
                %s306 = scalar_lea.vmem %s249, %s304
                %s307 = scalar_lea.vmem %s237, %s305 [#allocation2]
              $region49: #{emu3_downsample_nhwc.1} parent=43 // loop_footer
                %s263 = sadd.s32 %s261, 1
              $region50: #{emu3_downsample_nhwc.1} parent=43 // loop_footer_branch
                %260 = sbr.rel target = $region46
              $region51: #{emu3_downsample_nhwc.1} parent=43 // loop_exit
                _
              %s308 = sshrl.u32 %s241, 3
              %s309 = sand.u32 %s241, 7
              %s310 = smul.u32 %s308, 8
              %s311 = smul.u32 32, %s310
              %s312 = scalar_lea.vmem %s249, %s311
              %s313 = smul.u32 16, %s310
              %s314 = scalar_lea.vmem %s237, %s313 [#allocation2]
              // While loop
              $region52: #{emu3_downsample_nhwc.1} parent=43 // loop_pre_header
                _
              $region53: #{emu3_downsample_nhwc.1} parent=43 // loop_header
                %s316 = sphi 0, %s318
                %p317 = scmp.ge.s32.totalorder %s316, %s309
                %s321 = sphi 0, %s330
                %s322 = sphi %s312, %s333
                %s323 = sphi %s314, %s334
              $region54: #{emu3_downsample_nhwc.1} parent=43 // loop_header_branch
                %320 = sbr.rel (%p317) target = $region58
              $region55: #{emu3_downsample_nhwc.1} parent=43 // loop_body
                %v324 = vld [vmem:[%s322] sm:%s258]
                %325 = vst [vmem:[%s323] sm:%s258] %v324
                %v326 = vld [vmem:[%s322 + $0x8] sm:%s258]
                %327 = vst [vmem:[%s323 + $0x8] sm:%s258] %v326
                %s328 = sadd.s32 1, %s321
                %p329 = scmp.ge.s32.totalorder %s328, %s309
                %s330 = scalar_select %p329, 0, %s328
                %s331 = smul.u32 %s330, 32
                %s332 = smul.u32 %s330, 16
                %s333 = scalar_lea.vmem %s312, %s331
                %s334 = scalar_lea.vmem %s314, %s332 [#allocation2]
              $region56: #{emu3_downsample_nhwc.1} parent=43 // loop_footer
                %s318 = sadd.s32 %s316, 1
              $region57: #{emu3_downsample_nhwc.1} parent=43 // loop_footer_branch
                %315 = sbr.rel target = $region53
              $region58: #{emu3_downsample_nhwc.1} parent=43 // loop_exit
                _
            $region44: #{emu3_downsample_nhwc.1} parent=35 // pred_fallthru
              _
          $region36: #{emu3_downsample_nhwc.1} parent=31 // pred_fallthru
            _
          %415 = vnop
        $region32: #{emu3_downsample_nhwc.1} parent=27 // pred_fallthru
          _
        // Predicated region
        $region81: #{emu3_downsample_nhwc.1} parent=27 // pred_check
          %p416 = pneg %p74
        $region82: #{emu3_downsample_nhwc.1} parent=27 // pred_check_branch
          %418 = sbr.rel (%p416) target = $region84
        $region83: #{emu3_downsample_nhwc.1} parent=27 // pred_region
          %s419 = sand.u32 %s64, 1
          %s420 = sand.u32 %s64, 1
          %s421 = smul.addr %s420, 128
          %s422 = scalar_lea.vmem [#allocation3], %s421
          %s423 = smul.u32 8, %s20
          %s424 = ssub.s32 9, %s423
          %p425 = scmp.lt.s32.totalorder %s424, 8
          %s426 = scalar_select %p425, %s424, 8
          %s427 = smul.u32 8, %s426
          %s428 = smul.u32 %s427, 2
          %p429 = scmp.ne.s32.totalorder 0, %s428
          %s430 = smul.addr %s423, 4
          %s431 = sadd.s32 2, %s430
          %s432 = smul.addr %s19, 36
          %s433 = sadd.s32 %s431, %s432
          %s434 = smul.addr %s433, 8
          %s435 = scalar_lea.vmem %s1, %s434
          // Predicated region
          $region85: #{emu3_downsample_nhwc.1} parent=83 // pred_check
            %p436 = pneg %p429
          $region86: #{emu3_downsample_nhwc.1} parent=83 // pred_check_branch
            %438 = sbr.rel (%p436) target = $region88
          $region87: #{emu3_downsample_nhwc.1} parent=83 // pred_region
            // Predicated region
            $region89: #{emu3_downsample_nhwc.1} parent=87 // pred_check
              _
            $region90: #{emu3_downsample_nhwc.1} parent=87 // pred_check_branch
              %440 = sbr.rel (0) target = $region92
            $region91: #{emu3_downsample_nhwc.1} parent=87 // pred_region
              // Predicated region
              $region111: #{emu3_downsample_nhwc.1} parent=91 // pred_check
                _
              $region112: #{emu3_downsample_nhwc.1} parent=91 // pred_check_branch
                %522 = sbr.rel (0) target = $region114
              $region113: #{emu3_downsample_nhwc.1} parent=91 // pred_region
                %s523 = sshrl.u32 %s426, 3
                // While loop
                $region115: #{emu3_downsample_nhwc.1} parent=113 // loop_pre_header
                  _
                $region116: #{emu3_downsample_nhwc.1} parent=113 // loop_header
                  %s525 = sphi 0, %s527
                  %p526 = scmp.ge.s32.totalorder %s525, %s523
                  %s530 = sphi 0, %s567
                  %s531 = sphi %s435, %s570
                  %s532 = sphi %s422, %s571
                $region117: #{emu3_downsample_nhwc.1} parent=113 // loop_header_branch
                  %529 = sbr.rel (%p526) target = $region121
                $region118: #{emu3_downsample_nhwc.1} parent=113 // loop_body
                  %v533 = vld [vmem:[%s531] sm:$0xff]
                  %534 = vst [vmem:[%s532] sm:$0xff] %v533
                  %v535 = vld [vmem:[%s531 + $0x20] sm:$0xff]
                  %536 = vst [vmem:[%s532 + $0x10] sm:$0xff] %v535
                  %v537 = vld [vmem:[%s531 + $0x40] sm:$0xff]
                  %538 = vst [vmem:[%s532 + $0x20] sm:$0xff] %v537
                  %v539 = vld [vmem:[%s531 + $0x60] sm:$0xff]
                  %540 = vst [vmem:[%s532 + $0x30] sm:$0xff] %v539
                  %v541 = vld [vmem:[%s531 + $0x80] sm:$0xff]
                  %542 = vst [vmem:[%s532 + $0x40] sm:$0xff] %v541
                  %v543 = vld [vmem:[%s531 + $0xa0] sm:$0xff]
                  %544 = vst [vmem:[%s532 + $0x50] sm:$0xff] %v543
                  %v545 = vld [vmem:[%s531 + $0xc0] sm:$0xff]
                  %546 = vst [vmem:[%s532 + $0x60] sm:$0xff] %v545
                  %v547 = vld [vmem:[%s531 + $0xe0] sm:$0xff]
                  %548 = vst [vmem:[%s532 + $0x70] sm:$0xff] %v547
                  %v549 = vld [vmem:[%s531 + $0x8] sm:$0xff]
                  %550 = vst [vmem:[%s532 + $0x8] sm:$0xff] %v549
                  %v551 = vld [vmem:[%s531 + $0x28] sm:$0xff]
                  %552 = vst [vmem:[%s532 + $0x18] sm:$0xff] %v551
                  %v553 = vld [vmem:[%s531 + $0x48] sm:$0xff]
                  %554 = vst [vmem:[%s532 + $0x28] sm:$0xff] %v553
                  %v555 = vld [vmem:[%s531 + $0x68] sm:$0xff]
                  %556 = vst [vmem:[%s532 + $0x38] sm:$0xff] %v555
                  %v557 = vld [vmem:[%s531 + $0x88] sm:$0xff]
                  %558 = vst [vmem:[%s532 + $0x48] sm:$0xff] %v557
                  %v559 = vld [vmem:[%s531 + $0xa8] sm:$0xff]
                  %560 = vst [vmem:[%s532 + $0x58] sm:$0xff] %v559
                  %v561 = vld [vmem:[%s531 + $0xc8] sm:$0xff]
                  %562 = vst [vmem:[%s532 + $0x68] sm:$0xff] %v561
                  %v563 = vld [vmem:[%s531 + $0xe8] sm:$0xff]
                  %564 = vst [vmem:[%s532 + $0x78] sm:$0xff] %v563
                  %s565 = sadd.s32 1, %s530
                  %p566 = scmp.ge.s32.totalorder %s565, %s523
                  %s567 = scalar_select %p566, 0, %s565
                  %s568 = smul.u32 %s567, 256
                  %s569 = smul.u32 %s567, 128
                  %s570 = scalar_lea.vmem %s435, %s568
                  %s571 = scalar_lea.vmem %s422, %s569 [#allocation3]
                $region119: #{emu3_downsample_nhwc.1} parent=113 // loop_footer
                  %s527 = sadd.s32 %s525, 1
                $region120: #{emu3_downsample_nhwc.1} parent=113 // loop_footer_branch
                  %524 = sbr.rel target = $region116
                $region121: #{emu3_downsample_nhwc.1} parent=113 // loop_exit
                  _
                %s572 = sshrl.u32 %s426, 3
                %s573 = sand.u32 %s426, 7
                %s574 = smul.u32 %s572, 8
                %s575 = smul.u32 32, %s574
                %s576 = scalar_lea.vmem %s435, %s575
                %s577 = smul.u32 16, %s574
                %s578 = scalar_lea.vmem %s422, %s577 [#allocation3]
                // While loop
                $region122: #{emu3_downsample_nhwc.1} parent=113 // loop_pre_header
                  _
                $region123: #{emu3_downsample_nhwc.1} parent=113 // loop_header
                  %s580 = sphi 0, %s582
                  %p581 = scmp.ge.s32.totalorder %s580, %s573
                  %s585 = sphi 0, %s594
                  %s586 = sphi %s576, %s597
                  %s587 = sphi %s578, %s598
                $region124: #{emu3_downsample_nhwc.1} parent=113 // loop_header_branch
                  %584 = sbr.rel (%p581) target = $region128
                $region125: #{emu3_downsample_nhwc.1} parent=113 // loop_body
                  %v588 = vld [vmem:[%s586] sm:$0xff]
                  %589 = vst [vmem:[%s587] sm:$0xff] %v588
                  %v590 = vld [vmem:[%s586 + $0x8] sm:$0xff]
                  %591 = vst [vmem:[%s587 + $0x8] sm:$0xff] %v590
                  %s592 = sadd.s32 1, %s585
                  %p593 = scmp.ge.s32.totalorder %s592, %s573
                  %s594 = scalar_select %p593, 0, %s592
                  %s595 = smul.u32 %s594, 32
                  %s596 = smul.u32 %s594, 16
                  %s597 = scalar_lea.vmem %s576, %s595
                  %s598 = scalar_lea.vmem %s578, %s596 [#allocation3]
                $region126: #{emu3_downsample_nhwc.1} parent=113 // loop_footer
                  %s582 = sadd.s32 %s580, 1
                $region127: #{emu3_downsample_nhwc.1} parent=113 // loop_footer_branch
                  %579 = sbr.rel target = $region123
                $region128: #{emu3_downsample_nhwc.1} parent=113 // loop_exit
                  _
              $region114: #{emu3_downsample_nhwc.1} parent=91 // pred_fallthru
                _
              // Predicated region
              $region129: #{emu3_downsample_nhwc.1} parent=91 // pred_check
                _
              $region130: #{emu3_downsample_nhwc.1} parent=91 // pred_check_branch
                %600 = sbr.rel target = $region132
              $region131: #{emu3_downsample_nhwc.1} parent=91 // pred_region
                _
              $region132: #{emu3_downsample_nhwc.1} parent=91 // pred_fallthru
                _
            $region92: #{emu3_downsample_nhwc.1} parent=87 // pred_fallthru
              _
            // Predicated region
            $region93: #{emu3_downsample_nhwc.1} parent=87 // pred_check
              _
            $region94: #{emu3_downsample_nhwc.1} parent=87 // pred_check_branch
              %442 = sbr.rel target = $region96
            $region95: #{emu3_downsample_nhwc.1} parent=87 // pred_region
              %s444 = ssub.s32 256, 1
              %s445 = sshrl.u32 %s426, 3
              // While loop
              $region97: #{emu3_downsample_nhwc.1} parent=95 // loop_pre_header
                _
              $region98: #{emu3_downsample_nhwc.1} parent=95 // loop_header
                %s447 = sphi 0, %s449
                %p448 = scmp.ge.s32.totalorder %s447, %s445
                %s452 = sphi 0, %s489
                %s453 = sphi %s435, %s492
                %s454 = sphi %s422, %s493
              $region99: #{emu3_downsample_nhwc.1} parent=95 // loop_header_branch
                %451 = sbr.rel (%p448) target = $region103
              $region100: #{emu3_downsample_nhwc.1} parent=95 // loop_body
                %v455 = vld [vmem:[%s453] sm:%s444]
                %456 = vst [vmem:[%s454] sm:%s444] %v455
                %v457 = vld [vmem:[%s453 + $0x20] sm:%s444]
                %458 = vst [vmem:[%s454 + $0x10] sm:%s444] %v457
                %v459 = vld [vmem:[%s453 + $0x40] sm:%s444]
                %460 = vst [vmem:[%s454 + $0x20] sm:%s444] %v459
                %v461 = vld [vmem:[%s453 + $0x60] sm:%s444]
                %462 = vst [vmem:[%s454 + $0x30] sm:%s444] %v461
                %v463 = vld [vmem:[%s453 + $0x80] sm:%s444]
                %464 = vst [vmem:[%s454 + $0x40] sm:%s444] %v463
                %v465 = vld [vmem:[%s453 + $0xa0] sm:%s444]
                %466 = vst [vmem:[%s454 + $0x50] sm:%s444] %v465
                %v467 = vld [vmem:[%s453 + $0xc0] sm:%s444]
                %468 = vst [vmem:[%s454 + $0x60] sm:%s444] %v467
                %v469 = vld [vmem:[%s453 + $0xe0] sm:%s444]
                %470 = vst [vmem:[%s454 + $0x70] sm:%s444] %v469
                %v471 = vld [vmem:[%s453 + $0x8] sm:%s444]
                %472 = vst [vmem:[%s454 + $0x8] sm:%s444] %v471
                %v473 = vld [vmem:[%s453 + $0x28] sm:%s444]
                %474 = vst [vmem:[%s454 + $0x18] sm:%s444] %v473
                %v475 = vld [vmem:[%s453 + $0x48] sm:%s444]
                %476 = vst [vmem:[%s454 + $0x28] sm:%s444] %v475
                %v477 = vld [vmem:[%s453 + $0x68] sm:%s444]
                %478 = vst [vmem:[%s454 + $0x38] sm:%s444] %v477
                %v479 = vld [vmem:[%s453 + $0x88] sm:%s444]
                %480 = vst [vmem:[%s454 + $0x48] sm:%s444] %v479
                %v481 = vld [vmem:[%s453 + $0xa8] sm:%s444]
                %482 = vst [vmem:[%s454 + $0x58] sm:%s444] %v481
                %v483 = vld [vmem:[%s453 + $0xc8] sm:%s444]
                %484 = vst [vmem:[%s454 + $0x68] sm:%s444] %v483
                %v485 = vld [vmem:[%s453 + $0xe8] sm:%s444]
                %486 = vst [vmem:[%s454 + $0x78] sm:%s444] %v485
                %s487 = sadd.s32 1, %s452
                %p488 = scmp.ge.s32.totalorder %s487, %s445
                %s489 = scalar_select %p488, 0, %s487
                %s490 = smul.u32 %s489, 256
                %s491 = smul.u32 %s489, 128
                %s492 = scalar_lea.vmem %s435, %s490
                %s493 = scalar_lea.vmem %s422, %s491 [#allocation3]
              $region101: #{emu3_downsample_nhwc.1} parent=95 // loop_footer
                %s449 = sadd.s32 %s447, 1
              $region102: #{emu3_downsample_nhwc.1} parent=95 // loop_footer_branch
                %446 = sbr.rel target = $region98
              $region103: #{emu3_downsample_nhwc.1} parent=95 // loop_exit
                _
              %s494 = sshrl.u32 %s426, 3
              %s495 = sand.u32 %s426, 7
              %s496 = smul.u32 %s494, 8
              %s497 = smul.u32 32, %s496
              %s498 = scalar_lea.vmem %s435, %s497
              %s499 = smul.u32 16, %s496
              %s500 = scalar_lea.vmem %s422, %s499 [#allocation3]
              // While loop
              $region104: #{emu3_downsample_nhwc.1} parent=95 // loop_pre_header
                _
              $region105: #{emu3_downsample_nhwc.1} parent=95 // loop_header
                %s502 = sphi 0, %s504
                %p503 = scmp.ge.s32.totalorder %s502, %s495
                %s507 = sphi 0, %s516
                %s508 = sphi %s498, %s519
                %s509 = sphi %s500, %s520
              $region106: #{emu3_downsample_nhwc.1} parent=95 // loop_header_branch
                %506 = sbr.rel (%p503) target = $region110
              $region107: #{emu3_downsample_nhwc.1} parent=95 // loop_body
                %v510 = vld [vmem:[%s508] sm:%s444]
                %511 = vst [vmem:[%s509] sm:%s444] %v510
                %v512 = vld [vmem:[%s508 + $0x8] sm:%s444]
                %513 = vst [vmem:[%s509 + $0x8] sm:%s444] %v512
                %s514 = sadd.s32 1, %s507
                %p515 = scmp.ge.s32.totalorder %s514, %s495
                %s516 = scalar_select %p515, 0, %s514
                %s517 = smul.u32 %s516, 32
                %s518 = smul.u32 %s516, 16
                %s519 = scalar_lea.vmem %s498, %s517
                %s520 = scalar_lea.vmem %s500, %s518 [#allocation3]
              $region108: #{emu3_downsample_nhwc.1} parent=95 // loop_footer
                %s504 = sadd.s32 %s502, 1
              $region109: #{emu3_downsample_nhwc.1} parent=95 // loop_footer_branch
                %501 = sbr.rel target = $region105
              $region110: #{emu3_downsample_nhwc.1} parent=95 // loop_exit
                _
            $region96: #{emu3_downsample_nhwc.1} parent=87 // pred_fallthru
              _
          $region88: #{emu3_downsample_nhwc.1} parent=83 // pred_fallthru
            _
          %601 = vnop
        $region84: #{emu3_downsample_nhwc.1} parent=27 // pred_fallthru
          _
        // Predicated region
        $region133: #{emu3_downsample_nhwc.1} parent=27 // pred_check
          %p602 = pneg %p106
        $region134: #{emu3_downsample_nhwc.1} parent=27 // pred_check_branch
          %604 = sbr.rel (%p602) target = $region136
        $region135: #{emu3_downsample_nhwc.1} parent=27 // pred_region
          %s605 = sadd.s32 %s20, 1
          %s606 = smul.u32 %s605, 8
          %p607 = scmp.lt.s32.totalorder %s19, 1
          %s608 = scalar_select %p607, %s19, 1
          %p609 = scmp.lt.s32.totalorder %s606, 8
          %s610 = scalar_select %p609, %s606, 8
          %s611 = smul.addr %s610, 4
          %s612 = smul.addr %s608, 36
          %s613 = sadd.s32 %s611, %s612
          %s614 = smul.addr %s613, 8
          %s615 = scalar_lea.vmem %s2, %s614
          %s616 = sadd.s32 %s20, 1
          %s617 = smul.u32 %s616, 8
        $region136: #{emu3_downsample_nhwc.1} parent=27 // pred_fallthru
          _
      $region28: #{emu3_downsample_nhwc.1} parent=5 // pred_fallthru
        _
      %p618 = scmp.le.s32.totalorder 1, %s12
      %p619 = scmp.lt.s32.totalorder %s12, 3
      %p620 = pnand %p618, %p619
      %p621 = pneg %p620
      // Predicated region
      $region137: #{emu3_downsample_nhwc.1} parent=5 // pred_check
        _
      $region138: #{emu3_downsample_nhwc.1} parent=5 // pred_check_branch
        %623 = sbr.rel (%p620) target = $region140
      $region139: #{emu3_downsample_nhwc.1} parent=5 // pred_region
        %s624 = ssub.s32 %s12, 1
        %s625 = sand.u32 %s39, 1
        %s626 = sand.u32 %s39, 1
        %s627 = smul.addr %s626, 128
        %s628 = scalar_lea.vmem [#allocation2], %s627
        // Predicated region
        $region141: #{emu3_downsample_nhwc.1} parent=139 // pred_check
          %p629 = pneg %p52
        $region142: #{emu3_downsample_nhwc.1} parent=139 // pred_check_branch
          %631 = sbr.rel (%p629) target = $region144
        $region143: #{emu3_downsample_nhwc.1} parent=139 // pred_region
          _
        $region144: #{emu3_downsample_nhwc.1} parent=139 // pred_fallthru
          _
        %s632 = sand.u32 %s67, 1
        %s633 = sand.u32 %s67, 1
        %s634 = smul.addr %s633, 128
        %s635 = scalar_lea.vmem [#allocation3], %s634
        // Predicated region
        $region145: #{emu3_downsample_nhwc.1} parent=139 // pred_check
          %p636 = pneg %p80
        $region146: #{emu3_downsample_nhwc.1} parent=139 // pred_check_branch
          %638 = sbr.rel (%p636) target = $region148
        $region147: #{emu3_downsample_nhwc.1} parent=139 // pred_region
          _
        $region148: #{emu3_downsample_nhwc.1} parent=139 // pred_fallthru
          _
        %s639 = sand.u32 %s39, 1
        %s640 = sand.u32 %s39, 1
        %s641 = smul.addr %s640, 128
        %s642 = scalar_lea.vmem [#allocation2], %s641
        %p643 = pneg %p52
        %p644 = pneg %p49
        %s645 = sand.u32 %s67, 1
        %s646 = sand.u32 %s67, 1
        %s647 = smul.addr %s646, 128
        %s648 = scalar_lea.vmem [#allocation3], %s647
        %p649 = pneg %p80
        %p650 = pneg %p77
        %s651 = sadd.s32 %s22, 1
        %s652 = smul.u32 %s651, 8
        %p653 = scmp.lt.s32.totalorder %s21, 1
        %s654 = scalar_select %p653, %s21, 1
        %p655 = scmp.lt.s32.totalorder %s652, 8
        %s656 = scalar_select %p655, %s652, 8
        %s657 = smul.addr %s656, 4
        %s658 = smul.addr %s654, 36
        %s659 = sadd.s32 %s657, %s658
        %s660 = smul.addr %s659, 8
        %s661 = scalar_lea.vmem %s2, %s660
        %p662 = pneg %p112
        %p663 = pneg %p109
        %p664 = pneg %p133
        %p665 = pneg %p130
        %p666 = pneg %p154
        %p667 = pneg %p151
        %p668 = pneg %p175
        %p669 = pneg %p172
        %p670 = pneg %p203
        %p671 = pneg %p200
        %s672 = smul.u32 8, %s22
        %p673 = scmp.lt.s32.totalorder %s21, 1
        %s674 = scalar_select %p673, %s21, 1
        %p675 = scmp.lt.s32.totalorder %s672, 7
        %s676 = scalar_select %p675, %s672, 7
        %s677 = smul.addr %s674, 8
        %s678 = sadd.s32 %s676, %s677
        %s679 = smul.addr %s678, 8
        %s680 = scalar_lea.vmem %s6, %s679
        %s681 = smul.u32 8, %s22
        %s682 = ssub.s32 9, %s681
        %p683 = scmp.lt.s32.totalorder %s682, 8
        %s684 = scalar_select %p683, %s682, 8
        %s685 = smul.u32 8, %s684
        %s686 = smul.u32 %s685, 2
        %s687 = smul.u32 8, %s22
        %s688 = ssub.s32 9, %s687
        %p689 = scmp.lt.s32.totalorder %s688, 8
        %s690 = scalar_select %p689, %s688, 8
        %s691 = smul.u32 8, %s690
        %s692 = smul.u32 %s691, 2
        %s693 = sadd.s32 %s22, 1
        %s694 = smul.u32 %s693, 8
        %p695 = scmp.lt.s32.totalorder %s21, 1
        %s696 = scalar_select %p695, %s21, 1
        %p697 = scmp.lt.s32.totalorder %s694, 8
        %s698 = scalar_select %p697, %s694, 8
        %s699 = smul.addr %s698, 4
        %s700 = smul.addr %s696, 36
        %s701 = sadd.s32 %s699, %s700
        %s702 = smul.addr %s701, 8
        %s703 = scalar_lea.vmem %s2, %s702
        %s704 = sadd.s32 %s22, 1
        %s705 = smul.u32 %s704, 8
        %s706 = smul.u32 8, %s22
        %p707 = scmp.lt.s32.totalorder %s21, 1
        %s708 = scalar_select %p707, %s21, 1
        %p709 = scmp.lt.s32.totalorder %s706, 7
        %s710 = scalar_select %p709, %s706, 7
        %s711 = smul.addr %s708, 8
        %s712 = sadd.s32 %s710, %s711
        %s713 = smul.addr %s712, 8
        %s714 = scalar_lea.vmem %s6, %s713
        %s715 = smul.u32 8, %s22
        %v716 = vld [vmem:[%s628] sm:$0xff]
        %v717 = vld [vmem:[%s628 + $0x8] sm:$0xff]
        %v718 = vld [vmem:[%s628 + $0x10] sm:$0xff]
        %v719 = vld [vmem:[%s628 + $0x18] sm:$0xff]
        %v720 = vld [vmem:[%s628 + $0x20] sm:$0xff]
        %v721 = vld [vmem:[%s628 + $0x28] sm:$0xff]
        %v722 = vld [vmem:[%s628 + $0x30] sm:$0xff]
        %v723 = vld [vmem:[%s628 + $0x38] sm:$0xff]
        %v724 = vld [vmem:[%s628 + $0x40] sm:$0xff]
        %v725 = vld [vmem:[%s628 + $0x48] sm:$0xff]
        %v726 = vld [vmem:[%s628 + $0x50] sm:$0xff]
        %v727 = vld [vmem:[%s628 + $0x58] sm:$0xff]
        %v728 = vld [vmem:[%s628 + $0x60] sm:$0xff]
        %v729 = vld [vmem:[%s628 + $0x68] sm:$0xff]
        %v730 = vld [vmem:[%s628 + $0x70] sm:$0xff]
        %v731 = vld [vmem:[%s628 + $0x78] sm:$0xff]
        %v732 = vld [vmem:[%s635] sm:$0xff]
        %v733 = vld [vmem:[%s635 + $0x8] sm:$0xff]
        %v734 = vld [vmem:[%s635 + $0x10] sm:$0xff]
        %v735 = vld [vmem:[%s635 + $0x18] sm:$0xff]
        %v736 = vld [vmem:[%s635 + $0x20] sm:$0xff]
        %v737 = vld [vmem:[%s635 + $0x28] sm:$0xff]
        %v738 = vld [vmem:[%s635 + $0x30] sm:$0xff]
        %v739 = vld [vmem:[%s635 + $0x38] sm:$0xff]
        %v740 = vld [vmem:[%s635 + $0x40] sm:$0xff]
        %v741 = vld [vmem:[%s635 + $0x48] sm:$0xff]
        %v742 = vld [vmem:[%s635 + $0x50] sm:$0xff]
        %v743 = vld [vmem:[%s635 + $0x58] sm:$0xff]
        %v744 = vld [vmem:[%s635 + $0x60] sm:$0xff]
        %v745 = vld [vmem:[%s635 + $0x68] sm:$0xff]
        %v746 = vld [vmem:[%s635 + $0x70] sm:$0xff]
        %v747 = vld [vmem:[%s635 + $0x78] sm:$0xff]
        %v748 = vld [vmem:[%s703] sm:$0xff]
        %v749 = vld [vmem:[%s703 + $0x8] sm:$0xff]
        %v750 = vld [vmem:[%s3] sm:$0xff]
        %vm751 = vcmask 64512
        %v753 = vsel %vm751, %v716, 0
        %v756 = vsel %vm751, %v717, 0
        %v759 = vsel %vm751, %v718, 0
        %v762 = vsel %vm751, %v719, 0
        %v765 = vsel %vm751, %v720, 0
        %v768 = vsel %vm751, %v721, 0
        %v771 = vsel %vm751, %v722, 0
        %v774 = vsel %vm751, %v723, 0
        %v777 = vsel %vm751, %v724, 0
        %v780 = vsel %vm751, %v725, 0
        %v783 = vsel %vm751, %v726, 0
        %v786 = vsel %vm751, %v727, 0
        %v789 = vsel %vm751, %v728, 0
        %v792 = vsel %vm751, %v729, 0
        %v795 = vsel %vm751, %v730, 0
        %v798 = vsel %vm751, %v731, 0
        %800 = vmatpush.msra.mxu0 0.0
        %801 = vmatpush.msra.mxu0 0.0
        %802 = vmatpush.msra.mxu0 0.0
        %803 = vmatpush.msra.mxu0 0.0
        %804 = vmatpush.msra.mxu0 0.0
        %805 = vmatpush.msra.mxu0 0.0
        %806 = vmatpush.msra.mxu0 0.0
        %807 = vmatpush.msra.mxu0 0.0
        %808 = vmatpush.msra.mxu0 0.0
        %809 = vmatpush.msra.mxu0 0.0
        %810 = vmatpush.msra.mxu0 0.0
        %811 = vmatpush.msra.mxu0 0.0
        %812 = vmatpush.msra.mxu0 0.0
        %813 = vmatpush.msra.mxu0 0.0
        %814 = vmatpush.msra.mxu0 0.0
        %815 = vmatpush.msra.mxu0 %v750
        %816 = vmatmul.f32.gmra.mxu0 %v753
        %v817 = vpop.f32.mrf.mxu0
        %v818 = vadd.f32 0.0, %v817
        %819 = vmatmul.f32.gmra.mxu0 %v756
        %v820 = vpop.f32.mrf.mxu0
        %v821 = vadd.f32 0.0, %v820
        %822 = vmatmul.f32.gmra.mxu0 %v759
        %v823 = vpop.f32.mrf.mxu0
        %v824 = vadd.f32 0.0, %v823
        %825 = vmatmul.f32.gmra.mxu0 %v762
        %v826 = vpop.f32.mrf.mxu0
        %v827 = vadd.f32 0.0, %v826
        %828 = vmatmul.f32.gmra.mxu0 %v765
        %v829 = vpop.f32.mrf.mxu0
        %v830 = vadd.f32 0.0, %v829
        %831 = vmatmul.f32.gmra.mxu0 %v768
        %v832 = vpop.f32.mrf.mxu0
        %v833 = vadd.f32 0.0, %v832
        %834 = vmatmul.f32.gmra.mxu0 %v771
        %v835 = vpop.f32.mrf.mxu0
        %v836 = vadd.f32 0.0, %v835
        %837 = vmatmul.f32.gmra.mxu0 %v774
        %v838 = vpop.f32.mrf.mxu0
        %v839 = vadd.f32 0.0, %v838
        %840 = vmatmul.f32.gmra.mxu0 %v777
        %v841 = vpop.f32.mrf.mxu0
        %v842 = vadd.f32 0.0, %v841
        %843 = vmatmul.f32.gmra.mxu0 %v780
        %v844 = vpop.f32.mrf.mxu0
        %v845 = vadd.f32 0.0, %v844
        %846 = vmatmul.f32.gmra.mxu0 %v783
        %v847 = vpop.f32.mrf.mxu0
        %v848 = vadd.f32 0.0, %v847
        %849 = vmatmul.f32.gmra.mxu0 %v786
        %v850 = vpop.f32.mrf.mxu0
        %v851 = vadd.f32 0.0, %v850
        %852 = vmatmul.f32.gmra.mxu0 %v789
        %v853 = vpop.f32.mrf.mxu0
        %v854 = vadd.f32 0.0, %v853
        %855 = vmatmul.f32.gmra.mxu0 %v792
        %v856 = vpop.f32.mrf.mxu0
        %v857 = vadd.f32 0.0, %v856
        %858 = vmatmul.f32.gmra.mxu0 %v795
        %v859 = vpop.f32.mrf.mxu0
        %v860 = vadd.f32 0.0, %v859
        %861 = vmatmul.f32.gmra.mxu0 %v798
        %v862 = vpop.f32.mrf.mxu0
        %v863 = vadd.f32 0.0, %v862
        %864 = vdwg.mxu0
        %v865 = vld [vmem:[%s4] sm:$0xff]
        %v867 = vsel %vm751, %v732, 0
        %v870 = vsel %vm751, %v733, 0
        %v873 = vsel %vm751, %v734, 0
        %v876 = vsel %vm751, %v735, 0
        %v879 = vsel %vm751, %v736, 0
        %v882 = vsel %vm751, %v737, 0
        %v885 = vsel %vm751, %v738, 0
        %v888 = vsel %vm751, %v739, 0
        %v891 = vsel %vm751, %v740, 0
        %v894 = vsel %vm751, %v741, 0
        %v897 = vsel %vm751, %v742, 0
        %v900 = vsel %vm751, %v743, 0
        %v903 = vsel %vm751, %v744, 0
        %v906 = vsel %vm751, %v745, 0
        %v909 = vsel %vm751, %v746, 0
        %v912 = vsel %vm751, %v747, 0
        %914 = vmatpush.msra.mxu0 0.0
        %915 = vmatpush.msra.mxu0 0.0
        %916 = vmatpush.msra.mxu0 0.0
        %917 = vmatpush.msra.mxu0 0.0
        %918 = vmatpush.msra.mxu0 0.0
        %919 = vmatpush.msra.mxu0 0.0
        %920 = vmatpush.msra.mxu0 0.0
        %921 = vmatpush.msra.mxu0 0.0
        %922 = vmatpush.msra.mxu0 0.0
        %923 = vmatpush.msra.mxu0 0.0
        %924 = vmatpush.msra.mxu0 0.0
        %925 = vmatpush.msra.mxu0 0.0
        %926 = vmatpush.msra.mxu0 0.0
        %927 = vmatpush.msra.mxu0 0.0
        %928 = vmatpush.msra.mxu0 0.0
        %929 = vmatpush.msra.mxu0 %v865
        %930 = vmatmul.f32.gmra.mxu0 %v867
        %v931 = vpop.f32.mrf.mxu0
        %v932 = vadd.f32 0.0, %v931
        %933 = vmatmul.f32.gmra.mxu0 %v870
        %v934 = vpop.f32.mrf.mxu0
        %v935 = vadd.f32 0.0, %v934
        %936 = vmatmul.f32.gmra.mxu0 %v873
        %v937 = vpop.f32.mrf.mxu0
        %v938 = vadd.f32 0.0, %v937
        %939 = vmatmul.f32.gmra.mxu0 %v876
        %v940 = vpop.f32.mrf.mxu0
        %v941 = vadd.f32 0.0, %v940
        %942 = vmatmul.f32.gmra.mxu0 %v879
        %v943 = vpop.f32.mrf.mxu0
        %v944 = vadd.f32 0.0, %v943
        %945 = vmatmul.f32.gmra.mxu0 %v882
        %v946 = vpop.f32.mrf.mxu0
        %v947 = vadd.f32 0.0, %v946
        %948 = vmatmul.f32.gmra.mxu0 %v885
        %v949 = vpop.f32.mrf.mxu0
        %v950 = vadd.f32 0.0, %v949
        %951 = vmatmul.f32.gmra.mxu0 %v888
        %v952 = vpop.f32.mrf.mxu0
        %v953 = vadd.f32 0.0, %v952
        %954 = vmatmul.f32.gmra.mxu0 %v891
        %v955 = vpop.f32.mrf.mxu0
        %v956 = vadd.f32 0.0, %v955
        %957 = vmatmul.f32.gmra.mxu0 %v894
        %v958 = vpop.f32.mrf.mxu0
        %v959 = vadd.f32 0.0, %v958
        %960 = vmatmul.f32.gmra.mxu0 %v897
        %v961 = vpop.f32.mrf.mxu0
        %v962 = vadd.f32 0.0, %v961
        %963 = vmatmul.f32.gmra.mxu0 %v900
        %v964 = vpop.f32.mrf.mxu0
        %v965 = vadd.f32 0.0, %v964
        %966 = vmatmul.f32.gmra.mxu0 %v903
        %v967 = vpop.f32.mrf.mxu0
        %v968 = vadd.f32 0.0, %v967
        %969 = vmatmul.f32.gmra.mxu0 %v906
        %v970 = vpop.f32.mrf.mxu0
        %v971 = vadd.f32 0.0, %v970
        %972 = vmatmul.f32.gmra.mxu0 %v909
        %v973 = vpop.f32.mrf.mxu0
        %v974 = vadd.f32 0.0, %v973
        %975 = vmatmul.f32.gmra.mxu0 %v912
        %v976 = vpop.f32.mrf.mxu0
        %v977 = vadd.f32 0.0, %v976
        %978 = vdwg.mxu0
        %v980 = vsel %vm751, %v748, 0
        %v983 = vsel %vm751, %v749, 0
        %985 = vmatpush.msra.mxu0 0.0
        %986 = vmatpush.msra.mxu0 0.0
        %987 = vmatpush.msra.mxu0 0.0
        %988 = vmatpush.msra.mxu0 0.0
        %989 = vmatpush.msra.mxu0 0.0
        %990 = vmatpush.msra.mxu0 0.0
        %991 = vmatpush.msra.mxu0 0.0
        %992 = vmatpush.msra.mxu0 0.0
        %993 = vmatpush.msra.mxu0 0.0
        %994 = vmatpush.msra.mxu0 0.0
        %995 = vmatpush.msra.mxu0 0.0
        %996 = vmatpush.msra.mxu0 0.0
        %997 = vmatpush.msra.mxu0 0.0
        %998 = vmatpush.msra.mxu0 0.0
        %999 = vmatpush.msra.mxu0 0.0
        %1000 = vmatpush.msra.mxu0 %v750
        %1001 = vmatmul.f32.gmra.mxu0 %v980
        %v1002 = vpop.f32.mrf.mxu0
        %v1003 = vadd.f32 0.0, %v1002
        %1004 = vmatmul.f32.gmra.mxu0 %v983
        %v1005 = vpop.f32.mrf.mxu0
        %v1006 = vadd.f32 0.0, %v1005
        %1007 = vdwg.mxu0
        %v1008 = vld [vmem:[%s5] sm:$0x1]
        %v1009 = vadd.f32 %v818, %v932
        %v1010 = vadd.f32 %v824, %v938
        %v1011 = vadd.f32 %v830, %v944
        %v1012 = vadd.f32 %v836, %v950
        %v1013 = vadd.f32 %v842, %v956
        %v1014 = vadd.f32 %v848, %v962
        %v1015 = vadd.f32 %v854, %v968
        %v1016 = vadd.f32 %v860, %v974
        %v1018 = vperm.slane %v1008, 0
        %v1020 = vadd.f32 %v1009, %v1018
        %v1021 = vadd.f32 %v1010, %v1018
        %v1022 = vadd.f32 %v1011, %v1018
        %v1023 = vadd.f32 %v1012, %v1018
        %v1024 = vadd.f32 %v1013, %v1018
        %v1025 = vadd.f32 %v1014, %v1018
        %v1026 = vadd.f32 %v1015, %v1018
        %v1027 = vadd.f32 %v1016, %v1018
        %1044 = vrot.lane.b32.xlu0 %v932, 4
        %v1045 = vpop.permute.xlu0 %1044
        %1046 = vrot.lane.b32.xlu0 %v935, 4
        %v1047 = vpop.permute.xlu0 %1046
        %1048 = vrot.lane.b32.xlu0 %v938, 4
        %v1049 = vpop.permute.xlu0 %1048
        %1050 = vrot.lane.b32.xlu0 %v941, 4
        %v1051 = vpop.permute.xlu0 %1050
        %1052 = vrot.lane.b32.xlu0 %v944, 4
        %v1053 = vpop.permute.xlu0 %1052
        %1054 = vrot.lane.b32.xlu0 %v947, 4
        %v1055 = vpop.permute.xlu0 %1054
        %1056 = vrot.lane.b32.xlu0 %v950, 4
        %v1057 = vpop.permute.xlu0 %1056
        %1058 = vrot.lane.b32.xlu0 %v953, 4
        %v1059 = vpop.permute.xlu0 %1058
        %1060 = vrot.lane.b32.xlu0 %v956, 4
        %v1061 = vpop.permute.xlu0 %1060
        %1062 = vrot.lane.b32.xlu0 %v959, 4
        %v1063 = vpop.permute.xlu0 %1062
        %1064 = vrot.lane.b32.xlu0 %v962, 4
        %v1065 = vpop.permute.xlu0 %1064
        %1066 = vrot.lane.b32.xlu0 %v965, 4
        %v1067 = vpop.permute.xlu0 %1066
        %1068 = vrot.lane.b32.xlu0 %v968, 4
        %v1069 = vpop.permute.xlu0 %1068
        %1070 = vrot.lane.b32.xlu0 %v971, 4
        %v1071 = vpop.permute.xlu0 %1070
        %1072 = vrot.lane.b32.xlu0 %v974, 4
        %v1073 = vpop.permute.xlu0 %1072
        %1074 = vrot.lane.b32.xlu0 %v977, 4
        %v1075 = vpop.permute.xlu0 %1074
        %v1092 = vadd.f32 %v818, %v1045
        %v1093 = vadd.f32 %v821, %v1047
        %v1094 = vadd.f32 %v824, %v1049
        %v1095 = vadd.f32 %v827, %v1051
        %v1096 = vadd.f32 %v830, %v1053
        %v1097 = vadd.f32 %v833, %v1055
        %v1098 = vadd.f32 %v836, %v1057
        %v1099 = vadd.f32 %v839, %v1059
        %v1100 = vadd.f32 %v842, %v1061
        %v1101 = vadd.f32 %v845, %v1063
        %v1102 = vadd.f32 %v848, %v1065
        %v1103 = vadd.f32 %v851, %v1067
        %v1104 = vadd.f32 %v854, %v1069
        %v1105 = vadd.f32 %v857, %v1071
        %v1106 = vadd.f32 %v860, %v1073
        %v1107 = vadd.f32 %v863, %v1075
        %vm1122 = vcmask 1046528
        %v1123 = vrot.slane %v1092, 1
        %v1124 = vrot.slane %v1093, 1
        %v1125 = vsel %vm1122, %v1123, %v1124
        %v1126 = vrot.slane %v1094, 1
        %v1127 = vrot.slane %v1095, 1
        %v1128 = vsel %vm1122, %v1126, %v1127
        %v1129 = vrot.slane %v1096, 1
        %v1130 = vrot.slane %v1097, 1
        %v1131 = vsel %vm1122, %v1129, %v1130
        %v1132 = vrot.slane %v1098, 1
        %v1133 = vrot.slane %v1099, 1
        %v1134 = vsel %vm1122, %v1132, %v1133
        %v1135 = vrot.slane %v1100, 1
        %v1136 = vrot.slane %v1101, 1
        %v1137 = vsel %vm1122, %v1135, %v1136
        %v1138 = vrot.slane %v1102, 1
        %v1139 = vrot.slane %v1103, 1
        %v1140 = vsel %vm1122, %v1138, %v1139
        %v1141 = vrot.slane %v1104, 1
        %v1142 = vrot.slane %v1105, 1
        %v1143 = vsel %vm1122, %v1141, %v1142
        %1144 = vrot.lane.b32.xlu0 %v1125, 120
        %v1145 = vpop.permute.xlu0 %1144
        %1146 = vrot.lane.b32.xlu0 %v1128, 120
        %v1147 = vpop.permute.xlu0 %1146
        %1148 = vrot.lane.b32.xlu0 %v1131, 120
        %v1149 = vpop.permute.xlu0 %1148
        %1150 = vrot.lane.b32.xlu0 %v1134, 120
        %v1151 = vpop.permute.xlu0 %1150
        %1152 = vrot.lane.b32.xlu0 %v1137, 120
        %v1153 = vpop.permute.xlu0 %1152
        %1154 = vrot.lane.b32.xlu0 %v1140, 120
        %v1155 = vpop.permute.xlu0 %1154
        %1156 = vrot.lane.b32.xlu0 %v1143, 120
        %v1157 = vpop.permute.xlu0 %1156
        %v1165 = vadd.f32 %v1020, %v1145
        %v1166 = vadd.f32 %v1021, %v1147
        %v1167 = vadd.f32 %v1022, %v1149
        %v1168 = vadd.f32 %v1023, %v1151
        %v1169 = vadd.f32 %v1024, %v1153
        %v1170 = vadd.f32 %v1025, %v1155
        %v1171 = vadd.f32 %v1026, %v1157
        %1179 = vrot.lane.b32.xlu0 %v824, 124
        %v1180 = vpop.permute.xlu0 %1179
        %1181 = vrot.lane.b32.xlu0 %v830, 124
        %v1182 = vpop.permute.xlu0 %1181
        %1183 = vrot.lane.b32.xlu0 %v836, 124
        %v1184 = vpop.permute.xlu0 %1183
        %1185 = vrot.lane.b32.xlu0 %v842, 124
        %v1186 = vpop.permute.xlu0 %1185
        %1187 = vrot.lane.b32.xlu0 %v848, 124
        %v1188 = vpop.permute.xlu0 %1187
        %1189 = vrot.lane.b32.xlu0 %v854, 124
        %v1190 = vpop.permute.xlu0 %1189
        %1191 = vrot.lane.b32.xlu0 %v860, 124
        %v1192 = vpop.permute.xlu0 %1191
        %v1200 = vadd.f32 %v1165, %v1180
        %v1201 = vadd.f32 %v1166, %v1182
        %v1202 = vadd.f32 %v1167, %v1184
        %v1203 = vadd.f32 %v1168, %v1186
        %v1204 = vadd.f32 %v1169, %v1188
        %v1205 = vadd.f32 %v1170, %v1190
        %v1206 = vadd.f32 %v1171, %v1192
        %v1214 = vrot.slane %v824, 1
        %v1215 = vrot.slane %v827, 1
        %v1216 = vsel %vm1122, %v1214, %v1215
        %v1217 = vrot.slane %v830, 1
        %v1218 = vrot.slane %v833, 1
        %v1219 = vsel %vm1122, %v1217, %v1218
        %v1220 = vrot.slane %v836, 1
        %v1221 = vrot.slane %v839, 1
        %v1222 = vsel %vm1122, %v1220, %v1221
        %v1223 = vrot.slane %v842, 1
        %v1224 = vrot.slane %v845, 1
        %v1225 = vsel %vm1122, %v1223, %v1224
        %v1226 = vrot.slane %v848, 1
        %v1227 = vrot.slane %v851, 1
        %v1228 = vsel %vm1122, %v1226, %v1227
        %v1229 = vrot.slane %v854, 1
        %v1230 = vrot.slane %v857, 1
        %v1231 = vsel %vm1122, %v1229, %v1230
        %v1232 = vrot.slane %v860, 1
        %v1233 = vrot.slane %v863, 1
        %v1234 = vsel %vm1122, %v1232, %v1233
        %1235 = vrot.lane.b32.xlu0 %v1216, 116
        %v1236 = vpop.permute.xlu0 %1235
        %1237 = vrot.lane.b32.xlu0 %v1219, 116
        %v1238 = vpop.permute.xlu0 %1237
        %1239 = vrot.lane.b32.xlu0 %v1222, 116
        %v1240 = vpop.permute.xlu0 %1239
        %1241 = vrot.lane.b32.xlu0 %v1225, 116
        %v1242 = vpop.permute.xlu0 %1241
        %1243 = vrot.lane.b32.xlu0 %v1228, 116
        %v1244 = vpop.permute.xlu0 %1243
        %1245 = vrot.lane.b32.xlu0 %v1231, 116
        %v1246 = vpop.permute.xlu0 %1245
        %1247 = vrot.lane.b32.xlu0 %v1234, 116
        %v1248 = vpop.permute.xlu0 %1247
        %v1256 = vadd.f32 %v1200, %v1236
        %v1257 = vadd.f32 %v1201, %v1238
        %v1258 = vadd.f32 %v1202, %v1240
        %v1259 = vadd.f32 %v1203, %v1242
        %v1260 = vadd.f32 %v1204, %v1244
        %v1261 = vadd.f32 %v1205, %v1246
        %v1262 = vadd.f32 %v1206, %v1248
        %vm1263 = vcmask 31744
        %1264 = vst.msk [vmem:[%s714] sm:$0xff] %vm1263, %v1256
        %1265 = vst.msk [vmem:[%s714 + $0x8] sm:$0xff] %vm1263, %v1257
        %1266 = vst.msk [vmem:[%s714 + $0x10] sm:$0xff] %vm1263, %v1258
        %1267 = vst.msk [vmem:[%s714 + $0x18] sm:$0xff] %vm1263, %v1259
        %1268 = vst.msk [vmem:[%s714 + $0x20] sm:$0xff] %vm1263, %v1260
        %1269 = vst.msk [vmem:[%s714 + $0x28] sm:$0xff] %vm1263, %v1261
        %1270 = vst.msk [vmem:[%s714 + $0x30] sm:$0xff] %vm1263, %v1262
        %v1273 = vrot.slane %v1106, 1
        %v1274 = vrot.slane %v1107, 1
        %v1275 = vsel %vm1122, %v1273, %v1274
        %1276 = vrot.lane.b32.xlu0 %v1275, 120
        %v1277 = vpop.permute.xlu0 %1276
        %v1279 = vadd.f32 %v1027, %v1277
        %1281 = vrot.lane.b32.xlu0 %v1003, 124
        %v1282 = vpop.permute.xlu0 %1281
        %v1284 = vadd.f32 %v1279, %v1282
        %v1286 = vrot.slane %v1003, 1
        %v1287 = vrot.slane %v1006, 1
        %v1288 = vsel %vm1122, %v1286, %v1287
        %1289 = vrot.lane.b32.xlu0 %v1288, 116
        %v1290 = vpop.permute.xlu0 %1289
        %v1292 = vadd.f32 %v1284, %v1290
        %s1293 = scalar_lea.vmem %s714, 56
        %1294 = vst.msk [vmem:[%s1293] sm:$0xff] %vm1263, %v1292
        %s1295 = smul.u32 8, %s22
        %p1296 = scmp.lt.s32.totalorder %s21, 1
        %s1297 = scalar_select %p1296, %s21, 1
        %p1298 = scmp.lt.s32.totalorder %s1295, 7
        %s1299 = scalar_select %p1298, %s1295, 7
        %s1300 = smul.addr %s1297, 8
        %s1301 = sadd.s32 %s1299, %s1300
        %s1302 = smul.addr %s1301, 8
        %s1303 = scalar_lea.vmem %s6, %s1302
        // Predicated region
        $region149: #{emu3_downsample_nhwc.1} parent=139 // pred_check
          %p1304 = pneg %p200
        $region150: #{emu3_downsample_nhwc.1} parent=139 // pred_check_branch
          %1306 = sbr.rel (%p1304) target = $region152
        $region151: #{emu3_downsample_nhwc.1} parent=139 // pred_region
          %s1307 = smul.u32 8, %s22
        $region152: #{emu3_downsample_nhwc.1} parent=139 // pred_fallthru
          _
      $region140: #{emu3_downsample_nhwc.1} parent=5 // pred_fallthru
        _
      %p1308 = scmp.le.s32.totalorder 2, %s12
      // Predicated region
      $region153: #{emu3_downsample_nhwc.1} parent=5 // pred_check
        %p1309 = pneg %p1308
      $region154: #{emu3_downsample_nhwc.1} parent=5 // pred_check_branch
        %1311 = sbr.rel (%p1309) target = $region156
      $region155: #{emu3_downsample_nhwc.1} parent=5 // pred_region
        %s1312 = ssub.s32 %s12, 2
        // Predicated region
        $region157: #{emu3_downsample_nhwc.1} parent=155 // pred_check
          %p1313 = pneg %p206
        $region158: #{emu3_downsample_nhwc.1} parent=155 // pred_check_branch
          %1315 = sbr.rel (%p1313) target = $region160
        $region159: #{emu3_downsample_nhwc.1} parent=155 // pred_region
          %s1316 = smul.u32 8, %s24
          %p1317 = scmp.lt.s32.totalorder %s23, 1
          %s1318 = scalar_select %p1317, %s23, 1
          %p1319 = scmp.lt.s32.totalorder %s1316, 7
          %s1320 = scalar_select %p1319, %s1316, 7
          %s1321 = smul.addr %s1318, 8
          %s1322 = sadd.s32 %s1320, %s1321
          %s1323 = smul.addr %s1322, 8
          %s1324 = scalar_lea.vmem %s6, %s1323
        $region160: #{emu3_downsample_nhwc.1} parent=155 // pred_fallthru
          _
      $region156: #{emu3_downsample_nhwc.1} parent=5 // pred_fallthru
        _
    $region6: #{emu3_downsample_nhwc.1} parent=1 // loop_footer
      %s16 = sadd.s32 1, %s12
    $region7: #{emu3_downsample_nhwc.1} parent=1 // loop_footer_branch
      %11 = sbr.rel target = $region3
    $region8: #{emu3_downsample_nhwc.1} parent=1 // loop_exit
      _

</llo_original>
